<compile_context>
chip_gen: v7x
topology: tpu7x:2x2x1
jax: 0.10.0
libtpu: 0.0.40
codegen_flags: <defaults>
</compile_context>

<pallas_src>
import jax
import jax.numpy as jnp
from jax.experimental import pallas as pl
from jax.experimental.pallas import tpu as pltpu

IN_CH = 12                  # GCLSTM in_channels (== sequence_len in the experiment)
OUT_CH = 3                  # GCLSTM out_channels
GP = 4                      # per-gate row padding: 3 real channels + 1 zero row
GATE_CH = 4 * GP            # 16 packed gate rows: [i(4) | f(4) | c(4) | o(4)]
CHEB_K = 1                  # kernel (and the edge_index bypass) is only valid for K == 1

# dot_general dimension_numbers for "A (g, k) . B (n, k)^T -> (g, n)":
# contraction over the minor dim of BOTH operands (same pattern as attention q.k^T),
# which gives channel-major results from node-major tiles with no transposes.
_DN_NT = (((1,), (1,)), ((), ()))


def _gclstm_seq_kernel(x_ref, h0_ref, c0_ref, eye_ref, wx_ref, wh_ref, b_ref,
                       wc_ref, lin_ref, y_ref, hT_ref, cT_ref, h_s, c_s):
    t = pl.program_id(1)

    @pl.when(t == 0)
    def _init():
        # Convert the node-major (TN, 3) initial state tile into the channel-major
        # (4, TN) VMEM-resident state with a tiny MXU op (eye is (4, 3), last row 0).
        h_s[...] = jax.lax.dot_general(eye_ref[...], h0_ref[...], _DN_NT,
                                       preferred_element_type=jnp.float32)
        c_s[...] = jax.lax.dot_general(eye_ref[...], c0_ref[...], _DN_NT,
                                       preferred_element_type=jnp.float32)

    # All four gates in one fused MXU op pair (channel-major, lane-dense):
    #   pre (16, TN) = Wx (16, 12) . x_t (TN, 12)^T + Wh (16, 4) @ H (4, TN) + b
    pre = jax.lax.dot_general(wx_ref[...], x_ref[...], _DN_NT,
                              preferred_element_type=jnp.float32)
    pre = pre + jnp.dot(wh_ref[...], h_s[...], preferred_element_type=jnp.float32)
    pre = pre + b_ref[...]                                   # (16, 1) lane broadcast

    c_old = c_s[...]                                         # (4, TN), row 3 == 0
    c_old2 = jnp.concatenate([c_old, c_old], axis=0)         # (8, TN) for i|f peepholes

    # sigmoid(x) = 0.5 * tanh(0.5 x) + 0.5  (single EUP pass); i and f share one
    # 4-sublane-aligned (8, TN) activation slab.
    if_pre = pre[0:2 * GP, :] + wc_ref[0:2 * GP, :] * c_old2
    if_act = 0.5 * jnp.tanh(0.5 * if_pre) + 0.5
    i_g = if_act[0:GP, :]
    f_g = if_act[GP:2 * GP, :]
    t_g = jnp.tanh(pre[2 * GP:3 * GP, :])

    c_new = f_g * c_old + i_g * t_g                          # padded row stays 0
    o_pre = pre[3 * GP:4 * GP, :] + wc_ref[3 * GP:4 * GP, :] * c_new
    o_g = 0.5 * jnp.tanh(0.5 * o_pre) + 0.5
    h_new = o_g * jnp.tanh(c_new)

    h_s[...] = h_new
    c_s[...] = c_new

    # Linear(3, 1) readout: three scalar-row FMAs, no cross-sublane XLU reduce.
    hr = jnp.maximum(h_new, 0.0)
    y = (lin_ref[0:1, :] * hr[0:1, :]
         + lin_ref[1:2, :] * hr[1:2, :]
         + lin_ref[2:3, :] * hr[2:3, :]
         + lin_ref[3:4, :])
    y_ref[...] = y

    @pl.when(t == pl.num_programs(1) - 1)
    def _finalize():
        hT_ref[...] = h_s[...]
        cT_ref[...] = c_s[...]


def _choose_node_tiling(n):
    # Per grid step Pallas costs ~0.35 us; at ~100 B/node a tile needs thousands of
    # nodes before its DMA time matches that overhead, so small/medium graphs run as
    # ONE grid step (full-extent blocks are always legal, so no padding needed).
    if n <= 16384:
        return n, n, 1
    # Large graphs: lane-dense 8192-node tiles, padded up to the tile boundary so the
    # grid is well shaped (and v7x's two TensorCores each get >= ~1 us of work).
    tn = 8192
    n_pad = pl.cdiv(n, tn) * tn
    return tn, n_pad, n_pad // tn


@jax.jit
def recurrent_gcn_forward_seq(x_seq, edge_index, edge_weight, h, c, packed_params):
    """Runs the full T-step GCLSTM recurrence + per-step Linear(3, 1) readout in a
    single pallas_call.  Returns (y: (T, N, 1), H_T: (N, 3), C_T: (N, 3))."""
    # edge_index / edge_weight mirror the PyTorch signature; with ChebConv K == 1
    # (T_0(L) = I) the graph structure is mathematically unused.
    del edge_index, edge_weight
    wx, wh, b, wpeep, lin = packed_params
    T, N, in_ch = x_seq.shape
    assert in_ch == IN_CH and CHEB_K == 1

    tn, n_pad, n_tiles = _choose_node_tiling(N)
    x_seq = x_seq.astype(jnp.float32)
    h = h.astype(jnp.float32)
    c = c.astype(jnp.float32)
    if n_pad != N:
        # Padded tail lanes stay bounded (sigmoid/tanh) and never mix with real
        # lanes (all node work is lane-wise); they are sliced off below.
        x_seq = jnp.pad(x_seq, ((0, 0), (0, n_pad - N), (0, 0)))
        h = jnp.pad(h, ((0, n_pad - N), (0, 0)))
        c = jnp.pad(c, ((0, n_pad - N), (0, 0)))

    eye = jnp.eye(GP, OUT_CH, dtype=jnp.float32)              # (4, 3), last row zero
    const = lambda r, cc: pl.BlockSpec((r, cc), lambda i, t: (0, 0))

    y_cm, hT_cm, cT_cm = pl.pallas_call(
        _gclstm_seq_kernel,
        out_shape=(
            jax.ShapeDtypeStruct((T, 1, n_pad), jnp.float32),   # y_t (channel-major)
            jax.ShapeDtypeStruct((GP, n_pad), jnp.float32),     # H_T (channel-major)
            jax.ShapeDtypeStruct((GP, n_pad), jnp.float32),     # C_T (channel-major)
        ),
        grid_spec=pltpu.PrefetchScalarGridSpec(
            num_scalar_prefetch=0,
            grid=(n_tiles, T),
            in_specs=[
                pl.BlockSpec((None, tn, IN_CH), lambda i, t: (t, i, 0)),   # X_t tile
                pl.BlockSpec((tn, OUT_CH), lambda i, t: (i, 0)),           # H_0 tile
                pl.BlockSpec((tn, OUT_CH), lambda i, t: (i, 0)),           # C_0 tile
                const(GP, OUT_CH),                                         # eye (4,3)
                const(GATE_CH, IN_CH),                                     # Wx (16,12)
                const(GATE_CH, GP),                                        # Wh (16,4)
                const(GATE_CH, 1),                                         # folded biases
                const(GATE_CH, 1),                                         # peepholes
                const(GP, 1),                                              # [W_lin; b_lin]
            ],
            out_specs=[
                pl.BlockSpec((None, 1, tn), lambda i, t: (t, 0, i)),
                pl.BlockSpec((GP, tn), lambda i, t: (0, i)),
                pl.BlockSpec((GP, tn), lambda i, t: (0, i)),
            ],
            scratch_shapes=[pltpu.VMEM((GP, tn), jnp.float32),   # H state (resident)
                            pltpu.VMEM((GP, tn), jnp.float32)],  # C state (resident)
        ),
        compiler_params=pltpu.CompilerParams(
            dimension_semantics=("parallel", "arbitrary")),
    )(x_seq, h, c, eye, wx, wh, b, wpeep, lin)

    # Single transpose back to the node-major PyTorch layout, once at the very end.
    y = jnp.transpose(y_cm[:, :, :N], (0, 2, 1))       # (T, N, 1)
    hT = hT_cm[:OUT_CH, :N].T                          # (N, 3)
    cT = cT_cm[:OUT_CH, :N].T                          # (N, 3)
    return y, hT, cT


def recurrent_gcn_forward(x, edge_index, edge_weight, h, c, packed_params):
    """Single-step RecurrentGCN.forward: returns (linear(relu(H_0)), H_0, C_0)."""
    y, h0, c0 = recurrent_gcn_forward_seq(x[None], edge_index, edge_weight,
                                          h, c, packed_params)
    return y[0], h0, c0


# ----------------------------- parameters ----------------------------------------

def init_params(key):
    ks = jax.random.split(key, 7)
    # Glorot-uniform for W_{i,f,c,o}, ChebConv Theta and peepholes; zero biases
    # (matches torch_geometric_temporal's GCLSTM init; Linear uses torch default).
    limW = (6.0 / (IN_CH + OUT_CH)) ** 0.5
    W = jax.random.uniform(ks[0], (4, IN_CH, OUT_CH), jnp.float32, -limW, limW)
    limT = (6.0 / (OUT_CH + OUT_CH)) ** 0.5
    Theta = jax.random.uniform(ks[1], (4, OUT_CH, OUT_CH), jnp.float32, -limT, limT)
    limP = (6.0 / (1 + OUT_CH)) ** 0.5
    wci = jax.random.uniform(ks[2], (1, OUT_CH), jnp.float32, -limP, limP)
    wcf = jax.random.uniform(ks[3], (1, OUT_CH), jnp.float32, -limP, limP)
    wco = jax.random.uniform(ks[4], (1, OUT_CH), jnp.float32, -limP, limP)
    B = jnp.zeros((4, 1, OUT_CH), jnp.float32)
    Bconv = jnp.zeros((4, 1, OUT_CH), jnp.float32)
    limL = 1.0 / (OUT_CH ** 0.5)
    Wlin = jax.random.uniform(ks[5], (OUT_CH, 1), jnp.float32, -limL, limL)
    Blin = jax.random.uniform(ks[6], (1, 1), jnp.float32, -limL, limL)
    return W, Theta, B, Bconv, wci, wcf, wco, Wlin, Blin


def pack_params(raw_params):
    """Fold the per-gate weights / biases into fused, gate-padded channel-major
    operands: Wx (16,12), Wh (16,4), bias (16,1), peepholes (16,1), lin (4,1)."""
    W, Theta, B, Bconv, wci, wcf, wco, Wlin, Blin = raw_params

    def pad_rows(m):                       # (3, k) -> (4, k), zero 4th row
        return jnp.concatenate([m, jnp.zeros((1, m.shape[1]), jnp.float32)], axis=0)

    wx = jnp.concatenate([pad_rows(W[k].T) for k in range(4)], axis=0)
    wh = jnp.concatenate(
        [pad_rows(jnp.pad(Theta[k].T, ((0, 0), (0, GP - OUT_CH)))) for k in range(4)],
        axis=0)
    b = jnp.concatenate([pad_rows((B[k] + Bconv[k]).T) for k in range(4)], axis=0)
    zero_p = jnp.zeros((1, OUT_CH), jnp.float32)
    wpeep = jnp.concatenate([pad_rows(p.T) for p in (wci, wcf, zero_p, wco)], axis=0)
    lin = jnp.concatenate([Wlin, Blin], axis=0).astype(jnp.float32)
    return (wx.astype(jnp.float32), wh.astype(jnp.float32), b.astype(jnp.float32),
            wpeep.astype(jnp.float32), lin)


# ------------------------------ reference -----------------------------------------

def gclstm_step_ref(x, h, c, raw_params):
    """Pure-JAX reference of the exact PyTorch forward semantics (node-major)."""
    W, Theta, B, Bconv, wci, wcf, wco, Wlin, Blin = raw_params

    def gate(k, hh):
        return x @ W[k] + hh @ Theta[k] + Bconv[k] + B[k]

    i_g = jax.nn.sigmoid(gate(0, h) + wci * c)
    f_g = jax.nn.sigmoid(gate(1, h) + wcf * c)
    t_g = jnp.tanh(gate(2, h))
    c_new = f_g * c + i_g * t_g
    o_g = jax.nn.sigmoid(gate(3, h) + wco * c_new)   # old H, new C (GCLSTM order)
    h_new = o_g * jnp.tanh(c_new)
    y = jnp.maximum(h_new, 0.0) @ Wlin + Blin
    return y, h_new, c_new


def reference_seq(x_seq, h, c, raw_params):
    ys = []
    for t in range(x_seq.shape[0]):
        y, h, c = gclstm_step_ref(x_seq[t], h, c, raw_params)
        ys.append(y)
    return jnp.stack(ys, axis=0), h, c


# -------------------------------- demo --------------------------------------------

if __name__ == "__main__":
    N, T = 1024, 12              # nodes (sz dataset analogue), sequence_len = 12

    key = jax.random.PRNGKey(0)
    kx, kh, kc, kp = jax.random.split(key, 4)
    x_seq = jax.random.normal(kx, (T, N, IN_CH), jnp.float32)
    h0 = jax.random.normal(kh, (N, OUT_CH), jnp.float32)
    c0 = jax.random.normal(kc, (N, OUT_CH), jnp.float32)
    raw_params = init_params(kp)
    packed_params = pack_params(raw_params)

    # Deterministic synthetic adjacency (ring graph) -> edge_index / edge_weight,
    # mirroring adjacency_to_edge_index; unused by the K=1 ChebConv math.
    src = jnp.arange(N, dtype=jnp.int32)
    dst = (src + 1) % N
    edge_index = jnp.stack(
        [jnp.concatenate([src, dst]), jnp.concatenate([dst, src])], axis=0)
    edge_weight = jnp.ones((edge_index.shape[1], T), jnp.float32)

    # 1) Single-step forward (matches RecurrentGCN.forward exactly).
    y1, h1, c1 = recurrent_gcn_forward(x_seq[0], edge_index, edge_weight,
                                       h0, c0, packed_params)
    jax.block_until_ready((y1, h1, c1))
    y1_r, h1_r, c1_r = gclstm_step_ref(x_seq[0], h0, c0, raw_params)
    assert jnp.allclose(y1, y1_r, atol=2e-5, rtol=2e-4)
    assert jnp.allclose(h1, h1_r, atol=2e-5, rtol=2e-4)
    assert jnp.allclose(c1, c1_r, atol=2e-5, rtol=2e-4)

    # 2) Full T-step recurrence fused into ONE pallas_call (review item #1).
    ys, hT, cT = recurrent_gcn_forward_seq(x_seq, edge_index, edge_weight,
                                           h0, c0, packed_params)
    jax.block_until_ready((ys, hT, cT))
    ys_r, hT_r, cT_r = reference_seq(x_seq, h0, c0, raw_params)
    assert jnp.allclose(ys, ys_r, atol=1e-4, rtol=1e-3)
    assert jnp.allclose(hT, hT_r, atol=1e-4, rtol=1e-3)
    assert jnp.allclose(cT, cT_r, atol=1e-4, rtol=1e-3)

    print("KERNEL_OK")
</pallas_src>

<mosaic_0001>
module attributes {stable_mosaic.version = 11 : i64} {
  func.func @_gclstm_seq_kernel(%arg0: i32, %arg1: i32, %arg2: memref<1x1024x12xf32, #tpu.memory_space<vmem>>, %arg3: memref<1024x3xf32, #tpu.memory_space<vmem>>, %arg4: memref<1024x3xf32, #tpu.memory_space<vmem>>, %arg5: memref<4x3xf32, #tpu.memory_space<vmem>>, %arg6: memref<16x12xf32, #tpu.memory_space<vmem>>, %arg7: memref<16x4xf32, #tpu.memory_space<vmem>>, %arg8: memref<16x1xf32, #tpu.memory_space<vmem>>, %arg9: memref<16x1xf32, #tpu.memory_space<vmem>>, %arg10: memref<4x1xf32, #tpu.memory_space<vmem>>, %arg11: memref<1x1x1024xf32, #tpu.memory_space<vmem>>, %arg12: memref<4x1024xf32, #tpu.memory_space<vmem>>, %arg13: memref<4x1024xf32, #tpu.memory_space<vmem>>, %arg14: memref<4x1024xf32, #tpu.memory_space<vmem>>, %arg15: memref<4x1024xf32, #tpu.memory_space<vmem>>) attributes {dimension_semantics = [#tpu.dimension_semantics<parallel>, #tpu.dimension_semantics<arbitrary>], iteration_bounds = array<i64: 1, 1>, scalar_prefetch = 0 : i64, scratch_operands = 2 : i64, tpu.core_type = #tpu.core_type<tc>, window_params = [{transform_indices = @transform_0, window_bounds = array<i64: 1, 1024, 12>}, {transform_indices = @transform_1, window_bounds = array<i64: 1024, 3>}, {transform_indices = @transform_2, window_bounds = array<i64: 1024, 3>}, {pipeline_mode = #tpu.pipeline_mode<synchronous>, transform_indices = @transform_3, window_bounds = array<i64: 4, 3>}, {pipeline_mode = #tpu.pipeline_mode<synchronous>, transform_indices = @transform_4, window_bounds = array<i64: 16, 12>}, {pipeline_mode = #tpu.pipeline_mode<synchronous>, transform_indices = @transform_5, window_bounds = array<i64: 16, 4>}, {pipeline_mode = #tpu.pipeline_mode<synchronous>, transform_indices = @transform_6, window_bounds = array<i64: 16, 1>}, {pipeline_mode = #tpu.pipeline_mode<synchronous>, transform_indices = @transform_7, window_bounds = array<i64: 16, 1>}, {pipeline_mode = #tpu.pipeline_mode<synchronous>, transform_indices = @transform_8, window_bounds = array<i64: 4, 1>}, {transform_indices = @transform_9, window_bounds = array<i64: 1, 1, 1024>}, {transform_indices = @transform_10, window_bounds = array<i64: 4, 1024>}, {transform_indices = @transform_11, window_bounds = array<i64: 4, 1024>}]} {
    %c0_i32 = arith.constant 0 : i32
    %0 = arith.cmpi eq, %arg1, %c0_i32 : i32
    %1 = arith.extui %0 : i1 to i32
    %c0_i32_0 = arith.constant 0 : i32
    %2 = arith.cmpi ne, %1, %c0_i32_0 : i32
    scf.if %2 {
      %c0_38 = arith.constant 0 : index
      %c0_39 = arith.constant 0 : index
      %76 = vector.load %arg5[%c0_38, %c0_39] : memref<4x3xf32, #tpu.memory_space<vmem>>, vector<4x3xf32>
      %c0_40 = arith.constant 0 : index
      %c0_41 = arith.constant 0 : index
      %77 = vector.load %arg3[%c0_40, %c0_41] : memref<1024x3xf32, #tpu.memory_space<vmem>>, vector<1024x3xf32>
      %cst_42 = arith.constant dense<0.000000e+00> : vector<4x1024xf32>
      %78 = tpu.matmul %76, %77, %cst_42 {dimension_numbers = #tpu.dot_dimension_numbers<[1], [1], [0], [0], [0, 0, 1, 0], [], []>} : vector<4x3xf32>, vector<1024x3xf32>, vector<4x1024xf32> -> vector<4x1024xf32>
      %c0_43 = arith.constant 0 : index
      %c0_44 = arith.constant 0 : index
      %79 = vector.load %arg14[%c0_43, %c0_44] : memref<4x1024xf32, #tpu.memory_space<vmem>>, vector<4x1024xf32>
      tpu.vector_store %arg14[%c0_43, %c0_44], %78 {strides = array<i32>} : memref<4x1024xf32, #tpu.memory_space<vmem>>, vector<4x1024xf32>,
      %c0_45 = arith.constant 0 : index
      %c0_46 = arith.constant 0 : index
      %80 = vector.load %arg5[%c0_45, %c0_46] : memref<4x3xf32, #tpu.memory_space<vmem>>, vector<4x3xf32>
      %c0_47 = arith.constant 0 : index
      %c0_48 = arith.constant 0 : index
      %81 = vector.load %arg4[%c0_47, %c0_48] : memref<1024x3xf32, #tpu.memory_space<vmem>>, vector<1024x3xf32>
      %cst_49 = arith.constant dense<0.000000e+00> : vector<4x1024xf32>
      %82 = tpu.matmul %80, %81, %cst_49 {dimension_numbers = #tpu.dot_dimension_numbers<[1], [1], [0], [0], [0, 0, 1, 0], [], []>} : vector<4x3xf32>, vector<1024x3xf32>, vector<4x1024xf32> -> vector<4x1024xf32>
      %c0_50 = arith.constant 0 : index
      %c0_51 = arith.constant 0 : index
      %83 = vector.load %arg15[%c0_50, %c0_51] : memref<4x1024xf32, #tpu.memory_space<vmem>>, vector<4x1024xf32>
      tpu.vector_store %arg15[%c0_50, %c0_51], %82 {strides = array<i32>} : memref<4x1024xf32, #tpu.memory_space<vmem>>, vector<4x1024xf32>,
    } else {
    }
    %c0 = arith.constant 0 : index
    %c0_1 = arith.constant 0 : index
    %3 = vector.load %arg6[%c0, %c0_1] : memref<16x12xf32, #tpu.memory_space<vmem>>, vector<16x12xf32>
    %c0_2 = arith.constant 0 : index
    %c0_3 = arith.constant 0 : index
    %c0_4 = arith.constant 0 : index
    %4 = vector.load %arg2[%c0_2, %c0_3, %c0_4] : memref<1x1024x12xf32, #tpu.memory_space<vmem>>, vector<1x1024x12xf32>
    %5 = vector.shape_cast %4 : vector<1x1024x12xf32> to vector<1024x12xf32>
    %cst = arith.constant dense<0.000000e+00> : vector<16x1024xf32>
    %6 = tpu.matmul %3, %5, %cst {dimension_numbers = #tpu.dot_dimension_numbers<[1], [1], [0], [0], [0, 0, 1, 0], [], []>} : vector<16x12xf32>, vector<1024x12xf32>, vector<16x1024xf32> -> vector<16x1024xf32>
    %c0_5 = arith.constant 0 : index
    %c0_6 = arith.constant 0 : index
    %7 = vector.load %arg7[%c0_5, %c0_6] : memref<16x4xf32, #tpu.memory_space<vmem>>, vector<16x4xf32>
    %c0_7 = arith.constant 0 : index
    %c0_8 = arith.constant 0 : index
    %8 = vector.load %arg14[%c0_7, %c0_8] : memref<4x1024xf32, #tpu.memory_space<vmem>>, vector<4x1024xf32>
    %cst_9 = arith.constant dense<0.000000e+00> : vector<16x1024xf32>
    %9 = tpu.matmul %7, %8, %cst_9 {dimension_numbers = #tpu.dot_dimension_numbers<[1], [0], [0], [1], [0, 0, 1, 1], [], []>} : vector<16x4xf32>, vector<4x1024xf32>, vector<16x1024xf32> -> vector<16x1024xf32>
    %10 = arith.addf %6, %9 : vector<16x1024xf32>
    %c0_10 = arith.constant 0 : index
    %c0_11 = arith.constant 0 : index
    %11 = vector.load %arg8[%c0_10, %c0_11] : memref<16x1xf32, #tpu.memory_space<vmem>>, vector<16x1xf32>
    %12 = vector.broadcast %11 : vector<16x1xf32> to vector<16x1024xf32>
    %13 = arith.addf %10, %12 : vector<16x1024xf32>
    %c0_12 = arith.constant 0 : index
    %c0_13 = arith.constant 0 : index
    %14 = vector.load %arg15[%c0_12, %c0_13] : memref<4x1024xf32, #tpu.memory_space<vmem>>, vector<4x1024xf32>
    %15 = tpu.concatenate %14, %14 in 0 : vector<4x1024xf32>, vector<4x1024xf32> -> vector<8x1024xf32>
    %16 = vector.extract_strided_slice %13 {offsets = [0, 0], sizes = [8, 1024], strides = [1, 1]} : vector<16x1024xf32> to vector<8x1024xf32>
    %c0_14 = arith.constant 0 : index
    %c0_15 = arith.constant 0 : index
    %17 = vector.load %arg9[%c0_14, %c0_15] : memref<16x1xf32, #tpu.memory_space<vmem>>, vector<8x1xf32>
    %18 = vector.broadcast %17 : vector<8x1xf32> to vector<8x1024xf32>
    %19 = arith.mulf %18, %15 : vector<8x1024xf32>
    %20 = arith.addf %16, %19 : vector<8x1024xf32>
    %cst_16 = arith.constant 5.000000e-01 : f32
    %21 = vector.broadcast %cst_16 : f32 to vector<8x1024xf32>
    %22 = arith.mulf %21, %20 : vector<8x1024xf32>
    %23 = math.tanh %22 : vector<8x1024xf32>
    %cst_17 = arith.constant 5.000000e-01 : f32
    %24 = vector.broadcast %cst_17 : f32 to vector<8x1024xf32>
    %25 = arith.mulf %24, %23 : vector<8x1024xf32>
    %cst_18 = arith.constant 5.000000e-01 : f32
    %26 = vector.broadcast %cst_18 : f32 to vector<8x1024xf32>
    %27 = arith.addf %25, %26 : vector<8x1024xf32>
    %28 = vector.extract_strided_slice %27 {offsets = [0, 0], sizes = [4, 1024], strides = [1, 1]} : vector<8x1024xf32> to vector<4x1024xf32>
    %29 = vector.extract_strided_slice %27 {offsets = [4, 0], sizes = [4, 1024], strides = [1, 1]} : vector<8x1024xf32> to vector<4x1024xf32>
    %30 = vector.extract_strided_slice %13 {offsets = [8, 0], sizes = [4, 1024], strides = [1, 1]} : vector<16x1024xf32> to vector<4x1024xf32>
    %31 = math.tanh %30 : vector<4x1024xf32>
    %32 = arith.mulf %29, %14 : vector<4x1024xf32>
    %33 = arith.mulf %28, %31 : vector<4x1024xf32>
    %34 = arith.addf %32, %33 : vector<4x1024xf32>
    %35 = vector.extract_strided_slice %13 {offsets = [12, 0], sizes = [4, 1024], strides = [1, 1]} : vector<16x1024xf32> to vector<4x1024xf32>
    %c12 = arith.constant 12 : index
    %c0_19 = arith.constant 0 : index
    %36 = vector.load %arg9[%c12, %c0_19] : memref<16x1xf32, #tpu.memory_space<vmem>>, vector<4x1xf32>
    %37 = vector.broadcast %36 : vector<4x1xf32> to vector<4x1024xf32>
    %38 = arith.mulf %37, %34 : vector<4x1024xf32>
    %39 = arith.addf %35, %38 : vector<4x1024xf32>
    %cst_20 = arith.constant 5.000000e-01 : f32
    %40 = vector.broadcast %cst_20 : f32 to vector<4x1024xf32>
    %41 = arith.mulf %40, %39 : vector<4x1024xf32>
    %42 = math.tanh %41 : vector<4x1024xf32>
    %cst_21 = arith.constant 5.000000e-01 : f32
    %43 = vector.broadcast %cst_21 : f32 to vector<4x1024xf32>
    %44 = arith.mulf %43, %42 : vector<4x1024xf32>
    %cst_22 = arith.constant 5.000000e-01 : f32
    %45 = vector.broadcast %cst_22 : f32 to vector<4x1024xf32>
    %46 = arith.addf %44, %45 : vector<4x1024xf32>
    %47 = math.tanh %34 : vector<4x1024xf32>
    %48 = arith.mulf %46, %47 : vector<4x1024xf32>
    %c0_23 = arith.constant 0 : index
    %c0_24 = arith.constant 0 : index
    %49 = vector.load %arg14[%c0_23, %c0_24] : memref<4x1024xf32, #tpu.memory_space<vmem>>, vector<4x1024xf32>
    tpu.vector_store %arg14[%c0_23, %c0_24], %48 {strides = array<i32>} : memref<4x1024xf32, #tpu.memory_space<vmem>>, vector<4x1024xf32>,
    %c0_25 = arith.constant 0 : index
    %c0_26 = arith.constant 0 : index
    %50 = vector.load %arg15[%c0_25, %c0_26] : memref<4x1024xf32, #tpu.memory_space<vmem>>, vector<4x1024xf32>
    tpu.vector_store %arg15[%c0_25, %c0_26], %34 {strides = array<i32>} : memref<4x1024xf32, #tpu.memory_space<vmem>>, vector<4x1024xf32>,
    %cst_27 = arith.constant 0.000000e+00 : f32
    %51 = vector.broadcast %cst_27 : f32 to vector<4x1024xf32>
    %52 = arith.maximumf %48, %51 : vector<4x1024xf32>
    %c0_28 = arith.constant 0 : index
    %c0_29 = arith.constant 0 : index
    %53 = vector.load %arg10[%c0_28, %c0_29] : memref<4x1xf32, #tpu.memory_space<vmem>>, vector<1x1xf32>
    %54 = vector.extract_strided_slice %52 {offsets = [0, 0], sizes = [1, 1024], strides = [1, 1]} : vector<4x1024xf32> to vector<1x1024xf32>
    %55 = vector.broadcast %53 : vector<1x1xf32> to vector<1x1024xf32>
    %56 = arith.mulf %55, %54 : vector<1x1024xf32>
    %c1 = arith.constant 1 : index
    %c0_30 = arith.constant 0 : index
    %57 = vector.load %arg10[%c1, %c0_30] : memref<4x1xf32, #tpu.memory_space<vmem>>, vector<1x1xf32>
    %58 = vector.extract_strided_slice %52 {offsets = [1, 0], sizes = [1, 1024], strides = [1, 1]} : vector<4x1024xf32> to vector<1x1024xf32>
    %59 = vector.broadcast %57 : vector<1x1xf32> to vector<1x1024xf32>
    %60 = arith.mulf %59, %58 : vector<1x1024xf32>
    %61 = arith.addf %56, %60 : vector<1x1024xf32>
    %c2 = arith.constant 2 : index
    %c0_31 = arith.constant 0 : index
    %62 = vector.load %arg10[%c2, %c0_31] : memref<4x1xf32, #tpu.memory_space<vmem>>, vector<1x1xf32>
    %63 = vector.extract_strided_slice %52 {offsets = [2, 0], sizes = [1, 1024], strides = [1, 1]} : vector<4x1024xf32> to vector<1x1024xf32>
    %64 = vector.broadcast %62 : vector<1x1xf32> to vector<1x1024xf32>
    %65 = arith.mulf %64, %63 : vector<1x1024xf32>
    %66 = arith.addf %61, %65 : vector<1x1024xf32>
    %c3 = arith.constant 3 : index
    %c0_32 = arith.constant 0 : index
    %67 = vector.load %arg10[%c3, %c0_32] : memref<4x1xf32, #tpu.memory_space<vmem>>, vector<1x1xf32>
    %68 = vector.broadcast %67 : vector<1x1xf32> to vector<1x1024xf32>
    %69 = arith.addf %66, %68 : vector<1x1024xf32>
    %c0_33 = arith.constant 0 : index
    %c0_34 = arith.constant 0 : index
    %c0_35 = arith.constant 0 : index
    %70 = vector.load %arg11[%c0_33, %c0_34, %c0_35] : memref<1x1x1024xf32, #tpu.memory_space<vmem>>, vector<1x1x1024xf32>
    %71 = vector.shape_cast %70 : vector<1x1x1024xf32> to vector<1x1024xf32>
    %72 = vector.shape_cast %69 : vector<1x1024xf32> to vector<1x1x1024xf32>
    tpu.vector_store %arg11[%c0_33, %c0_34, %c0_35], %72 {strides = array<i32>} : memref<1x1x1024xf32, #tpu.memory_space<vmem>>, vector<1x1x1024xf32>,
    %c0_i32_36 = arith.constant 0 : i32
    %73 = arith.cmpi eq, %arg1, %c0_i32_36 : i32
    %74 = arith.extui %73 : i1 to i32
    %c0_i32_37 = arith.constant 0 : i32
    %75 = arith.cmpi ne, %74, %c0_i32_37 : i32
    scf.if %75 {
      %c0_38 = arith.constant 0 : index
      %c0_39 = arith.constant 0 : index
      %76 = vector.load %arg14[%c0_38, %c0_39] : memref<4x1024xf32, #tpu.memory_space<vmem>>, vector<4x1024xf32>
      %c0_40 = arith.constant 0 : index
      %c0_41 = arith.constant 0 : index
      %77 = vector.load %arg12[%c0_40, %c0_41] : memref<4x1024xf32, #tpu.memory_space<vmem>>, vector<4x1024xf32>
      tpu.vector_store %arg12[%c0_40, %c0_41], %76 {strides = array<i32>} : memref<4x1024xf32, #tpu.memory_space<vmem>>, vector<4x1024xf32>,
      %c0_42 = arith.constant 0 : index
      %c0_43 = arith.constant 0 : index
      %78 = vector.load %arg15[%c0_42, %c0_43] : memref<4x1024xf32, #tpu.memory_space<vmem>>, vector<4x1024xf32>
      %c0_44 = arith.constant 0 : index
      %c0_45 = arith.constant 0 : index
      %79 = vector.load %arg13[%c0_44, %c0_45] : memref<4x1024xf32, #tpu.memory_space<vmem>>, vector<4x1024xf32>
      tpu.vector_store %arg13[%c0_44, %c0_45], %78 {strides = array<i32>} : memref<4x1024xf32, #tpu.memory_space<vmem>>, vector<4x1024xf32>,
    } else {
    }
    return
  }
  func.func @transform_0(%arg0: i32, %arg1: i32) -> (i32, i32, i32) {
    %c0_i32 = arith.constant 0 : i32
    %c0_i32_0 = arith.constant 0 : i32
    return %arg1, %arg0, %c0_i32 : i32, i32, i32
  }
  func.func @transform_1(%arg0: i32, %arg1: i32) -> (i32, i32) {
    %c0_i32 = arith.constant 0 : i32
    %c0_i32_0 = arith.constant 0 : i32
    return %arg0, %c0_i32 : i32, i32
  }
  func.func @transform_2(%arg0: i32, %arg1: i32) -> (i32, i32) {
    %c0_i32 = arith.constant 0 : i32
    %c0_i32_0 = arith.constant 0 : i32
    return %arg0, %c0_i32 : i32, i32
  }
  func.func @transform_3(%arg0: i32, %arg1: i32) -> (i32, i32) {
    %c0_i32 = arith.constant 0 : i32
    %c0_i32_0 = arith.constant 0 : i32
    %c0_i32_1 = arith.constant 0 : i32
    return %c0_i32, %c0_i32_0 : i32, i32
  }
  func.func @transform_4(%arg0: i32, %arg1: i32) -> (i32, i32) {
    %c0_i32 = arith.constant 0 : i32
    %c0_i32_0 = arith.constant 0 : i32
    %c0_i32_1 = arith.constant 0 : i32
    return %c0_i32, %c0_i32_0 : i32, i32
  }
  func.func @transform_5(%arg0: i32, %arg1: i32) -> (i32, i32) {
    %c0_i32 = arith.constant 0 : i32
    %c0_i32_0 = arith.constant 0 : i32
    %c0_i32_1 = arith.constant 0 : i32
    return %c0_i32, %c0_i32_0 : i32, i32
  }
  func.func @transform_6(%arg0: i32, %arg1: i32) -> (i32, i32) {
    %c0_i32 = arith.constant 0 : i32
    %c0_i32_0 = arith.constant 0 : i32
    %c0_i32_1 = arith.constant 0 : i32
    return %c0_i32, %c0_i32_0 : i32, i32
  }
  func.func @transform_7(%arg0: i32, %arg1: i32) -> (i32, i32) {
    %c0_i32 = arith.constant 0 : i32
    %c0_i32_0 = arith.constant 0 : i32
    %c0_i32_1 = arith.constant 0 : i32
    return %c0_i32, %c0_i32_0 : i32, i32
  }
  func.func @transform_8(%arg0: i32, %arg1: i32) -> (i32, i32) {
    %c0_i32 = arith.constant 0 : i32
    %c0_i32_0 = arith.constant 0 : i32
    %c0_i32_1 = arith.constant 0 : i32
    return %c0_i32, %c0_i32_0 : i32, i32
  }
  func.func @transform_9(%arg0: i32, %arg1: i32) -> (i32, i32, i32) {
    %c0_i32 = arith.constant 0 : i32
    %c0_i32_0 = arith.constant 0 : i32
    return %arg1, %c0_i32, %arg0 : i32, i32, i32
  }
  func.func @transform_10(%arg0: i32, %arg1: i32) -> (i32, i32) {
    %c0_i32 = arith.constant 0 : i32
    %c0_i32_0 = arith.constant 0 : i32
    return %c0_i32, %arg0 : i32, i32
  }
  func.func @transform_11(%arg0: i32, %arg1: i32) -> (i32, i32) {
    %c0_i32 = arith.constant 0 : i32
    %c0_i32_0 = arith.constant 0 : i32
    return %c0_i32, %arg0 : i32, i32
  }
}

</mosaic_0001>

<llo_original>
// kernel: recurrent_gcn_forward_seq.1
$region0: #{recurrent_gcn_forward_seq.1}
  #allocation0 [shape = 'u32[]', space=smem, size = 0x4, offset = 0x4, fixed_abs, tag = 'smem constant byte address 0x4 - core index']
  #allocation1 [shape = 'u32[144,128]{1,0:T(1,128)}', space=vmem, size = 0x12000, scoped, tag = 'internal scratch']
  #allocation2 [shape = 'f32[4,1024]{1,0:T(4,128)}', space=vmem, size = 0x4000, scoped, tag = 'scratch operand']
  #allocation3 [shape = 'f32[4,1024]{1,0:T(4,128)}', space=vmem, size = 0x4000, scoped, tag = 'scratch operand']
  %s0 = inlined_call_operand.vmem [shape: f32[1,1024,12], index: 0, kind: input, shape index: {}]
  %s1 = inlined_call_operand.vmem [shape: f32[1024,3], index: 1, kind: input, shape index: {}]
  %s2 = inlined_call_operand.vmem [shape: f32[1024,3], index: 2, kind: input, shape index: {}]
  %s3 = inlined_call_operand.vmem [shape: f32[4,3], index: 3, kind: input, shape index: {}]
  %s4 = inlined_call_operand.vmem [shape: f32[16,12], index: 4, kind: input, shape index: {}]
  %s5 = inlined_call_operand.vmem [shape: f32[16,4], index: 5, kind: input, shape index: {}]
  %s6 = inlined_call_operand.vmem [shape: f32[16,1], index: 6, kind: input, shape index: {}]
  %s7 = inlined_call_operand.vmem [shape: f32[16,1], index: 7, kind: input, shape index: {}]
  %s8 = inlined_call_operand.vmem [shape: f32[4,1], index: 8, kind: input, shape index: {}]
  %s9 = inlined_call_operand.hbm [shape: f32[1,1,1024], index: 9, kind: output, shape index: {0}]
  %s10 = inlined_call_operand.vmem [shape: f32[4,1024], index: 10, kind: output, shape index: {1}]
  %s11 = inlined_call_operand.vmem [shape: f32[4,1024], index: 11, kind: output, shape index: {2}]
  %12 = xla_tuple %s9, %s10, %s11
  %s13 = sld [smem:[#allocation0]]
  $region70: #{recurrent_gcn_forward_seq.1} parent=0
    _
  %s15 = ssub.s32 1, %s13
  %s16 = scalar_select 0, %s15, %s13
  $region1: #{recurrent_gcn_forward_seq.1} parent=0
    #allocation4 [shape = 'u8[4096]{0}', space=vmem, size = 0x1000, scoped, tag = 'output window, operand 0, single buffered']
    #allocation5 [shape = 's32[1]{0}', space=sflag, size = 0x4, scoped, tag = 'scoped memory for recurrent_gcn_forward_seq.1']
    %17 = vsyncpa [#allocation5], 0
    // Predicated region
    $region2: #{recurrent_gcn_forward_seq.1} parent=1 // pred_check
      _
    $region3: #{recurrent_gcn_forward_seq.1} parent=1 // pred_check_branch
      %19 = sbr.rel (0) target = $region5
    $region4: #{recurrent_gcn_forward_seq.1} parent=1 // pred_region
      _
    $region5: #{recurrent_gcn_forward_seq.1} parent=1 // pred_fallthru
      _
    // Predicated region
    $region6: #{recurrent_gcn_forward_seq.1} parent=1 // pred_check
      _
    $region7: #{recurrent_gcn_forward_seq.1} parent=1 // pred_check_branch
      %21 = sbr.rel (0) target = $region9
    $region8: #{recurrent_gcn_forward_seq.1} parent=1 // pred_region
      _
    $region9: #{recurrent_gcn_forward_seq.1} parent=1 // pred_fallthru
      _
    // Predicated region
    $region10: #{recurrent_gcn_forward_seq.1} parent=1 // pred_check
      _
    $region11: #{recurrent_gcn_forward_seq.1} parent=1 // pred_check_branch
      %23 = sbr.rel (0) target = $region13
    $region12: #{recurrent_gcn_forward_seq.1} parent=1 // pred_region
      _
    $region13: #{recurrent_gcn_forward_seq.1} parent=1 // pred_fallthru
      _
    // Predicated region
    $region14: #{recurrent_gcn_forward_seq.1} parent=1 // pred_check
      _
    $region15: #{recurrent_gcn_forward_seq.1} parent=1 // pred_check_branch
      %25 = sbr.rel (0) target = $region17
    $region16: #{recurrent_gcn_forward_seq.1} parent=1 // pred_region
      _
    $region17: #{recurrent_gcn_forward_seq.1} parent=1 // pred_fallthru
      _
    // Predicated region
    $region18: #{recurrent_gcn_forward_seq.1} parent=1 // pred_check
      _
    $region19: #{recurrent_gcn_forward_seq.1} parent=1 // pred_check_branch
      %27 = sbr.rel (0) target = $region21
    $region20: #{recurrent_gcn_forward_seq.1} parent=1 // pred_region
      _
    $region21: #{recurrent_gcn_forward_seq.1} parent=1 // pred_fallthru
      _
    // Predicated region
    $region22: #{recurrent_gcn_forward_seq.1} parent=1 // pred_check
      _
    $region23: #{recurrent_gcn_forward_seq.1} parent=1 // pred_check_branch
      %29 = sbr.rel (0) target = $region25
    $region24: #{recurrent_gcn_forward_seq.1} parent=1 // pred_region
      _
    $region25: #{recurrent_gcn_forward_seq.1} parent=1 // pred_fallthru
      _
    // Predicated region
    $region26: #{recurrent_gcn_forward_seq.1} parent=1 // pred_check
      _
    $region27: #{recurrent_gcn_forward_seq.1} parent=1 // pred_check_branch
      %31 = sbr.rel (0) target = $region29
    $region28: #{recurrent_gcn_forward_seq.1} parent=1 // pred_region
      _
    $region29: #{recurrent_gcn_forward_seq.1} parent=1 // pred_fallthru
      _
    // Predicated region
    $region30: #{recurrent_gcn_forward_seq.1} parent=1 // pred_check
      _
    $region31: #{recurrent_gcn_forward_seq.1} parent=1 // pred_check_branch
      %33 = sbr.rel (0) target = $region33
    $region32: #{recurrent_gcn_forward_seq.1} parent=1 // pred_region
      _
    $region33: #{recurrent_gcn_forward_seq.1} parent=1 // pred_fallthru
      _
    // Predicated region
    $region34: #{recurrent_gcn_forward_seq.1} parent=1 // pred_check
      _
    $region35: #{recurrent_gcn_forward_seq.1} parent=1 // pred_check_branch
      %35 = sbr.rel (0) target = $region37
    $region36: #{recurrent_gcn_forward_seq.1} parent=1 // pred_region
      _
    $region37: #{recurrent_gcn_forward_seq.1} parent=1 // pred_fallthru
      _
    %p36 = scmp.eq.s32.totalorder 0, 0
    // Predicated region
    $region38: #{recurrent_gcn_forward_seq.1} parent=1 // pred_check
      %p37 = pneg %p36
    $region39: #{recurrent_gcn_forward_seq.1} parent=1 // pred_check_branch
      %39 = sbr.rel (%p37) target = $region41
    $region40: #{recurrent_gcn_forward_seq.1} parent=1 // pred_region
      %v40 = vld [vmem:[%s3] sm:$0xf]
      %v41 = vld [vmem:[%s1] sm:$0xff]
      %v42 = vld [vmem:[%s1 + $0x8] sm:$0xff]
      %v43 = vld [vmem:[%s1 + $0x10] sm:$0xff]
      %v44 = vld [vmem:[%s1 + $0x18] sm:$0xff]
      %v45 = vld [vmem:[%s1 + $0x20] sm:$0xff]
      %v46 = vld [vmem:[%s1 + $0x28] sm:$0xff]
      %v47 = vld [vmem:[%s1 + $0x30] sm:$0xff]
      %v48 = vld [vmem:[%s1 + $0x38] sm:$0xff]
      %v49 = vld [vmem:[%s1 + $0x40] sm:$0xff]
      %v50 = vld [vmem:[%s1 + $0x48] sm:$0xff]
      %v51 = vld [vmem:[%s1 + $0x50] sm:$0xff]
      %v52 = vld [vmem:[%s1 + $0x58] sm:$0xff]
      %v53 = vld [vmem:[%s1 + $0x60] sm:$0xff]
      %v54 = vld [vmem:[%s1 + $0x68] sm:$0xff]
      %v55 = vld [vmem:[%s1 + $0x70] sm:$0xff]
      %v56 = vld [vmem:[%s1 + $0x78] sm:$0xff]
      %v57 = vld [vmem:[%s1 + $0x80] sm:$0xff]
      %v58 = vld [vmem:[%s1 + $0x88] sm:$0xff]
      %v59 = vld [vmem:[%s1 + $0x90] sm:$0xff]
      %v60 = vld [vmem:[%s1 + $0x98] sm:$0xff]
      %v61 = vld [vmem:[%s1 + $0xa0] sm:$0xff]
      %v62 = vld [vmem:[%s1 + $0xa8] sm:$0xff]
      %v63 = vld [vmem:[%s1 + $0xb0] sm:$0xff]
      %v64 = vld [vmem:[%s1 + $0xb8] sm:$0xff]
      %v65 = vld [vmem:[%s1 + $0xc0] sm:$0xff]
      %v66 = vld [vmem:[%s1 + $0xc8] sm:$0xff]
      %v67 = vld [vmem:[%s1 + $0xd0] sm:$0xff]
      %v68 = vld [vmem:[%s1 + $0xd8] sm:$0xff]
      %v69 = vld [vmem:[%s1 + $0xe0] sm:$0xff]
      %v70 = vld [vmem:[%s1 + $0xe8] sm:$0xff]
      %v71 = vld [vmem:[%s1 + $0xf0] sm:$0xff]
      %v72 = vld [vmem:[%s1 + $0xf8] sm:$0xff]
      %v73 = vld [vmem:[%s1 + $0x100] sm:$0xff]
      %v74 = vld [vmem:[%s1 + $0x108] sm:$0xff]
      %v75 = vld [vmem:[%s1 + $0x110] sm:$0xff]
      %v76 = vld [vmem:[%s1 + $0x118] sm:$0xff]
      %v77 = vld [vmem:[%s1 + $0x120] sm:$0xff]
      %v78 = vld [vmem:[%s1 + $0x128] sm:$0xff]
      %v79 = vld [vmem:[%s1 + $0x130] sm:$0xff]
      %v80 = vld [vmem:[%s1 + $0x138] sm:$0xff]
      %v81 = vld [vmem:[%s1 + $0x140] sm:$0xff]
      %v82 = vld [vmem:[%s1 + $0x148] sm:$0xff]
      %v83 = vld [vmem:[%s1 + $0x150] sm:$0xff]
      %v84 = vld [vmem:[%s1 + $0x158] sm:$0xff]
      %v85 = vld [vmem:[%s1 + $0x160] sm:$0xff]
      %v86 = vld [vmem:[%s1 + $0x168] sm:$0xff]
      %v87 = vld [vmem:[%s1 + $0x170] sm:$0xff]
      %v88 = vld [vmem:[%s1 + $0x178] sm:$0xff]
      %v89 = vld [vmem:[%s1 + $0x180] sm:$0xff]
      %v90 = vld [vmem:[%s1 + $0x188] sm:$0xff]
      %v91 = vld [vmem:[%s1 + $0x190] sm:$0xff]
      %v92 = vld [vmem:[%s1 + $0x198] sm:$0xff]
      %v93 = vld [vmem:[%s1 + $0x1a0] sm:$0xff]
      %v94 = vld [vmem:[%s1 + $0x1a8] sm:$0xff]
      %v95 = vld [vmem:[%s1 + $0x1b0] sm:$0xff]
      %v96 = vld [vmem:[%s1 + $0x1b8] sm:$0xff]
      %v97 = vld [vmem:[%s1 + $0x1c0] sm:$0xff]
      %v98 = vld [vmem:[%s1 + $0x1c8] sm:$0xff]
      %v99 = vld [vmem:[%s1 + $0x1d0] sm:$0xff]
      %v100 = vld [vmem:[%s1 + $0x1d8] sm:$0xff]
      %v101 = vld [vmem:[%s1 + $0x1e0] sm:$0xff]
      %v102 = vld [vmem:[%s1 + $0x1e8] sm:$0xff]
      %v103 = vld [vmem:[%s1 + $0x1f0] sm:$0xff]
      %v104 = vld [vmem:[%s1 + $0x1f8] sm:$0xff]
      %v105 = vld [vmem:[%s1 + $0x200] sm:$0xff]
      %v106 = vld [vmem:[%s1 + $0x208] sm:$0xff]
      %v107 = vld [vmem:[%s1 + $0x210] sm:$0xff]
      %v108 = vld [vmem:[%s1 + $0x218] sm:$0xff]
      %v109 = vld [vmem:[%s1 + $0x220] sm:$0xff]
      %v110 = vld [vmem:[%s1 + $0x228] sm:$0xff]
      %v111 = vld [vmem:[%s1 + $0x230] sm:$0xff]
      %v112 = vld [vmem:[%s1 + $0x238] sm:$0xff]
      %v113 = vld [vmem:[%s1 + $0x240] sm:$0xff]
      %v114 = vld [vmem:[%s1 + $0x248] sm:$0xff]
      %v115 = vld [vmem:[%s1 + $0x250] sm:$0xff]
      %v116 = vld [vmem:[%s1 + $0x258] sm:$0xff]
      %v117 = vld [vmem:[%s1 + $0x260] sm:$0xff]
      %v118 = vld [vmem:[%s1 + $0x268] sm:$0xff]
      %v119 = vld [vmem:[%s1 + $0x270] sm:$0xff]
      %v120 = vld [vmem:[%s1 + $0x278] sm:$0xff]
      %v121 = vld [vmem:[%s1 + $0x280] sm:$0xff]
      %v122 = vld [vmem:[%s1 + $0x288] sm:$0xff]
      %v123 = vld [vmem:[%s1 + $0x290] sm:$0xff]
      %v124 = vld [vmem:[%s1 + $0x298] sm:$0xff]
      %v125 = vld [vmem:[%s1 + $0x2a0] sm:$0xff]
      %v126 = vld [vmem:[%s1 + $0x2a8] sm:$0xff]
      %v127 = vld [vmem:[%s1 + $0x2b0] sm:$0xff]
      %v128 = vld [vmem:[%s1 + $0x2b8] sm:$0xff]
      %v129 = vld [vmem:[%s1 + $0x2c0] sm:$0xff]
      %v130 = vld [vmem:[%s1 + $0x2c8] sm:$0xff]
      %v131 = vld [vmem:[%s1 + $0x2d0] sm:$0xff]
      %v132 = vld [vmem:[%s1 + $0x2d8] sm:$0xff]
      %v133 = vld [vmem:[%s1 + $0x2e0] sm:$0xff]
      %v134 = vld [vmem:[%s1 + $0x2e8] sm:$0xff]
      %v135 = vld [vmem:[%s1 + $0x2f0] sm:$0xff]
      %v136 = vld [vmem:[%s1 + $0x2f8] sm:$0xff]
      %v137 = vld [vmem:[%s1 + $0x300] sm:$0xff]
      %v138 = vld [vmem:[%s1 + $0x308] sm:$0xff]
      %v139 = vld [vmem:[%s1 + $0x310] sm:$0xff]
      %v140 = vld [vmem:[%s1 + $0x318] sm:$0xff]
      %v141 = vld [vmem:[%s1 + $0x320] sm:$0xff]
      %v142 = vld [vmem:[%s1 + $0x328] sm:$0xff]
      %v143 = vld [vmem:[%s1 + $0x330] sm:$0xff]
      %v144 = vld [vmem:[%s1 + $0x338] sm:$0xff]
      %v145 = vld [vmem:[%s1 + $0x340] sm:$0xff]
      %v146 = vld [vmem:[%s1 + $0x348] sm:$0xff]
      %v147 = vld [vmem:[%s1 + $0x350] sm:$0xff]
      %v148 = vld [vmem:[%s1 + $0x358] sm:$0xff]
      %v149 = vld [vmem:[%s1 + $0x360] sm:$0xff]
      %v150 = vld [vmem:[%s1 + $0x368] sm:$0xff]
      %v151 = vld [vmem:[%s1 + $0x370] sm:$0xff]
      %v152 = vld [vmem:[%s1 + $0x378] sm:$0xff]
      %v153 = vld [vmem:[%s1 + $0x380] sm:$0xff]
      %v154 = vld [vmem:[%s1 + $0x388] sm:$0xff]
      %v155 = vld [vmem:[%s1 + $0x390] sm:$0xff]
      %v156 = vld [vmem:[%s1 + $0x398] sm:$0xff]
      %v157 = vld [vmem:[%s1 + $0x3a0] sm:$0xff]
      %v158 = vld [vmem:[%s1 + $0x3a8] sm:$0xff]
      %v159 = vld [vmem:[%s1 + $0x3b0] sm:$0xff]
      %v160 = vld [vmem:[%s1 + $0x3b8] sm:$0xff]
      %v161 = vld [vmem:[%s1 + $0x3c0] sm:$0xff]
      %v162 = vld [vmem:[%s1 + $0x3c8] sm:$0xff]
      %v163 = vld [vmem:[%s1 + $0x3d0] sm:$0xff]
      %v164 = vld [vmem:[%s1 + $0x3d8] sm:$0xff]
      %v165 = vld [vmem:[%s1 + $0x3e0] sm:$0xff]
      %v166 = vld [vmem:[%s1 + $0x3e8] sm:$0xff]
      %v167 = vld [vmem:[%s1 + $0x3f0] sm:$0xff]
      %v168 = vld [vmem:[%s1 + $0x3f8] sm:$0xff]
      %vm169 = vcmask 23552
      %v171 = vsel %vm169, %v40, 0
      %v174 = vsel %vm169, %v41, 0
      %v177 = vsel %vm169, %v42, 0
      %v180 = vsel %vm169, %v43, 0
      %v183 = vsel %vm169, %v44, 0
      %v186 = vsel %vm169, %v45, 0
      %v189 = vsel %vm169, %v46, 0
      %v192 = vsel %vm169, %v47, 0
      %v195 = vsel %vm169, %v48, 0
      %v198 = vsel %vm169, %v49, 0
      %v201 = vsel %vm169, %v50, 0
      %v204 = vsel %vm169, %v51, 0
      %v207 = vsel %vm169, %v52, 0
      %v210 = vsel %vm169, %v53, 0
      %v213 = vsel %vm169, %v54, 0
      %v216 = vsel %vm169, %v55, 0
      %v219 = vsel %vm169, %v56, 0
      %v222 = vsel %vm169, %v57, 0
      %v225 = vsel %vm169, %v58, 0
      %v228 = vsel %vm169, %v59, 0
      %v231 = vsel %vm169, %v60, 0
      %v234 = vsel %vm169, %v61, 0
      %v237 = vsel %vm169, %v62, 0
      %v240 = vsel %vm169, %v63, 0
      %v243 = vsel %vm169, %v64, 0
      %v246 = vsel %vm169, %v65, 0
      %v249 = vsel %vm169, %v66, 0
      %v252 = vsel %vm169, %v67, 0
      %v255 = vsel %vm169, %v68, 0
      %v258 = vsel %vm169, %v69, 0
      %v261 = vsel %vm169, %v70, 0
      %v264 = vsel %vm169, %v71, 0
      %v267 = vsel %vm169, %v72, 0
      %v270 = vsel %vm169, %v73, 0
      %v273 = vsel %vm169, %v74, 0
      %v276 = vsel %vm169, %v75, 0
      %v279 = vsel %vm169, %v76, 0
      %v282 = vsel %vm169, %v77, 0
      %v285 = vsel %vm169, %v78, 0
      %v288 = vsel %vm169, %v79, 0
      %v291 = vsel %vm169, %v80, 0
      %v294 = vsel %vm169, %v81, 0
      %v297 = vsel %vm169, %v82, 0
      %v300 = vsel %vm169, %v83, 0
      %v303 = vsel %vm169, %v84, 0
      %v306 = vsel %vm169, %v85, 0
      %v309 = vsel %vm169, %v86, 0
      %v312 = vsel %vm169, %v87, 0
      %v315 = vsel %vm169, %v88, 0
      %v318 = vsel %vm169, %v89, 0
      %v321 = vsel %vm169, %v90, 0
      %v324 = vsel %vm169, %v91, 0
      %v327 = vsel %vm169, %v92, 0
      %v330 = vsel %vm169, %v93, 0
      %v333 = vsel %vm169, %v94, 0
      %v336 = vsel %vm169, %v95, 0
      %v339 = vsel %vm169, %v96, 0
      %v342 = vsel %vm169, %v97, 0
      %v345 = vsel %vm169, %v98, 0
      %v348 = vsel %vm169, %v99, 0
      %v351 = vsel %vm169, %v100, 0
      %v354 = vsel %vm169, %v101, 0
      %v357 = vsel %vm169, %v102, 0
      %v360 = vsel %vm169, %v103, 0
      %v363 = vsel %vm169, %v104, 0
      %v366 = vsel %vm169, %v105, 0
      %v369 = vsel %vm169, %v106, 0
      %v372 = vsel %vm169, %v107, 0
      %v375 = vsel %vm169, %v108, 0
      %v378 = vsel %vm169, %v109, 0
      %v381 = vsel %vm169, %v110, 0
      %v384 = vsel %vm169, %v111, 0
      %v387 = vsel %vm169, %v112, 0
      %v390 = vsel %vm169, %v113, 0
      %v393 = vsel %vm169, %v114, 0
      %v396 = vsel %vm169, %v115, 0
      %v399 = vsel %vm169, %v116, 0
      %v402 = vsel %vm169, %v117, 0
      %v405 = vsel %vm169, %v118, 0
      %v408 = vsel %vm169, %v119, 0
      %v411 = vsel %vm169, %v120, 0
      %v414 = vsel %vm169, %v121, 0
      %v417 = vsel %vm169, %v122, 0
      %v420 = vsel %vm169, %v123, 0
      %v423 = vsel %vm169, %v124, 0
      %v426 = vsel %vm169, %v125, 0
      %v429 = vsel %vm169, %v126, 0
      %v432 = vsel %vm169, %v127, 0
      %v435 = vsel %vm169, %v128, 0
      %v438 = vsel %vm169, %v129, 0
      %v441 = vsel %vm169, %v130, 0
      %v444 = vsel %vm169, %v131, 0
      %v447 = vsel %vm169, %v132, 0
      %v450 = vsel %vm169, %v133, 0
      %v453 = vsel %vm169, %v134, 0
      %v456 = vsel %vm169, %v135, 0
      %v459 = vsel %vm169, %v136, 0
      %v462 = vsel %vm169, %v137, 0
      %v465 = vsel %vm169, %v138, 0
      %v468 = vsel %vm169, %v139, 0
      %v471 = vsel %vm169, %v140, 0
      %v474 = vsel %vm169, %v141, 0
      %v477 = vsel %vm169, %v142, 0
      %v480 = vsel %vm169, %v143, 0
      %v483 = vsel %vm169, %v144, 0
      %v486 = vsel %vm169, %v145, 0
      %v489 = vsel %vm169, %v146, 0
      %v492 = vsel %vm169, %v147, 0
      %v495 = vsel %vm169, %v148, 0
      %v498 = vsel %vm169, %v149, 0
      %v501 = vsel %vm169, %v150, 0
      %v504 = vsel %vm169, %v151, 0
      %v507 = vsel %vm169, %v152, 0
      %v510 = vsel %vm169, %v153, 0
      %v513 = vsel %vm169, %v154, 0
      %v516 = vsel %vm169, %v155, 0
      %v519 = vsel %vm169, %v156, 0
      %v522 = vsel %vm169, %v157, 0
      %v525 = vsel %vm169, %v158, 0
      %v528 = vsel %vm169, %v159, 0
      %v531 = vsel %vm169, %v160, 0
      %v534 = vsel %vm169, %v161, 0
      %v537 = vsel %vm169, %v162, 0
      %v540 = vsel %vm169, %v163, 0
      %v543 = vsel %vm169, %v164, 0
      %v546 = vsel %vm169, %v165, 0
      %v549 = vsel %vm169, %v166, 0
      %v552 = vsel %vm169, %v167, 0
      %v555 = vsel %vm169, %v168, 0
      %557 = vmatprep.subr.mxu0 0.0
      %558 = vmatpush1.xpose.msra.mxu0 %v174
      %559 = vmatprep.subr.mxu0 0.0
      %560 = vmatpush1.xpose.msra.mxu0 %v177
      %561 = vmatprep.subr.mxu0 0.0
      %562 = vmatpush1.xpose.msra.mxu0 %v180
      %563 = vmatprep.subr.mxu0 0.0
      %564 = vmatpush1.xpose.msra.mxu0 %v183
      %565 = vmatprep.subr.mxu0 0.0
      %566 = vmatpush1.xpose.msra.mxu0 %v186
      %567 = vmatprep.subr.mxu0 0.0
      %568 = vmatpush1.xpose.msra.mxu0 %v189
      %569 = vmatprep.subr.mxu0 0.0
      %570 = vmatpush1.xpose.msra.mxu0 %v192
      %571 = vmatprep.subr.mxu0 0.0
      %572 = vmatpush1.xpose.msra.mxu0 %v195
      %573 = vmatprep.subr.mxu0 0.0
      %574 = vmatpush1.xpose.msra.mxu0 %v198
      %575 = vmatprep.subr.mxu0 0.0
      %576 = vmatpush1.xpose.msra.mxu0 %v201
      %577 = vmatprep.subr.mxu0 0.0
      %578 = vmatpush1.xpose.msra.mxu0 %v204
      %579 = vmatprep.subr.mxu0 0.0
      %580 = vmatpush1.xpose.msra.mxu0 %v207
      %581 = vmatprep.subr.mxu0 0.0
      %582 = vmatpush1.xpose.msra.mxu0 %v210
      %583 = vmatprep.subr.mxu0 0.0
      %584 = vmatpush1.xpose.msra.mxu0 %v213
      %585 = vmatprep.subr.mxu0 0.0
      %586 = vmatpush1.xpose.msra.mxu0 %v216
      %587 = vmatprep.subr.mxu0 0.0
      %588 = vmatpush1.xpose.msra.mxu0 %v219
      %589 = vmatprep.subr.mxu0 0.0
      %590 = vmatpush1.xpose.msra.mxu0 %v222
      %591 = vmatprep.subr.mxu0 0.0
      %592 = vmatpush1.xpose.msra.mxu0 %v225
      %593 = vmatprep.subr.mxu0 0.0
      %594 = vmatpush1.xpose.msra.mxu0 %v228
      %595 = vmatprep.subr.mxu0 0.0
      %596 = vmatpush1.xpose.msra.mxu0 %v231
      %597 = vmatprep.subr.mxu0 0.0
      %598 = vmatpush1.xpose.msra.mxu0 %v234
      %599 = vmatprep.subr.mxu0 0.0
      %600 = vmatpush1.xpose.msra.mxu0 %v237
      %601 = vmatprep.subr.mxu0 0.0
      %602 = vmatpush1.xpose.msra.mxu0 %v240
      %603 = vmatprep.subr.mxu0 0.0
      %604 = vmatpush1.xpose.msra.mxu0 %v243
      %605 = vmatprep.subr.mxu0 0.0
      %606 = vmatpush1.xpose.msra.mxu0 %v246
      %607 = vmatprep.subr.mxu0 0.0
      %608 = vmatpush1.xpose.msra.mxu0 %v249
      %609 = vmatprep.subr.mxu0 0.0
      %610 = vmatpush1.xpose.msra.mxu0 %v252
      %611 = vmatprep.subr.mxu0 0.0
      %612 = vmatpush1.xpose.msra.mxu0 %v255
      %613 = vmatprep.subr.mxu0 0.0
      %614 = vmatpush1.xpose.msra.mxu0 %v258
      %615 = vmatprep.subr.mxu0 0.0
      %616 = vmatpush1.xpose.msra.mxu0 %v261
      %617 = vmatprep.subr.mxu0 0.0
      %618 = vmatpush1.xpose.msra.mxu0 %v264
      %619 = vmatprep.subr.mxu0 0.0
      %620 = vmatpush1.xpose.msra.mxu0 %v267
      %621 = vmatprep.mubr.f32.mxu0 0.0
      %622 = vmatmul.mubr.f32.gmra.mrb[0].mxu0 %v171
      %v623 = vpop.f32.mrb[0].mxu0
      %v624 = vadd.f32 0.0, %v623
      %v625 = vpop.f32.mrb[0].mxu0
      %v626 = vadd.f32 0.0, %v625
      %627 = vdwg.mxu0
      %628 = vmatprep.subr.mxu0 0.0
      %629 = vmatpush1.xpose.msra.mxu0 %v270
      %630 = vmatprep.subr.mxu0 0.0
      %631 = vmatpush1.xpose.msra.mxu0 %v273
      %632 = vmatprep.subr.mxu0 0.0
      %633 = vmatpush1.xpose.msra.mxu0 %v276
      %634 = vmatprep.subr.mxu0 0.0
      %635 = vmatpush1.xpose.msra.mxu0 %v279
      %636 = vmatprep.subr.mxu0 0.0
      %637 = vmatpush1.xpose.msra.mxu0 %v282
      %638 = vmatprep.subr.mxu0 0.0
      %639 = vmatpush1.xpose.msra.mxu0 %v285
      %640 = vmatprep.subr.mxu0 0.0
      %641 = vmatpush1.xpose.msra.mxu0 %v288
      %642 = vmatprep.subr.mxu0 0.0
      %643 = vmatpush1.xpose.msra.mxu0 %v291
      %644 = vmatprep.subr.mxu0 0.0
      %645 = vmatpush1.xpose.msra.mxu0 %v294
      %646 = vmatprep.subr.mxu0 0.0
      %647 = vmatpush1.xpose.msra.mxu0 %v297
      %648 = vmatprep.subr.mxu0 0.0
      %649 = vmatpush1.xpose.msra.mxu0 %v300
      %650 = vmatprep.subr.mxu0 0.0
      %651 = vmatpush1.xpose.msra.mxu0 %v303
      %652 = vmatprep.subr.mxu0 0.0
      %653 = vmatpush1.xpose.msra.mxu0 %v306
      %654 = vmatprep.subr.mxu0 0.0
      %655 = vmatpush1.xpose.msra.mxu0 %v309
      %656 = vmatprep.subr.mxu0 0.0
      %657 = vmatpush1.xpose.msra.mxu0 %v312
      %658 = vmatprep.subr.mxu0 0.0
      %659 = vmatpush1.xpose.msra.mxu0 %v315
      %660 = vmatprep.subr.mxu0 0.0
      %661 = vmatpush1.xpose.msra.mxu0 %v318
      %662 = vmatprep.subr.mxu0 0.0
      %663 = vmatpush1.xpose.msra.mxu0 %v321
      %664 = vmatprep.subr.mxu0 0.0
      %665 = vmatpush1.xpose.msra.mxu0 %v324
      %666 = vmatprep.subr.mxu0 0.0
      %667 = vmatpush1.xpose.msra.mxu0 %v327
      %668 = vmatprep.subr.mxu0 0.0
      %669 = vmatpush1.xpose.msra.mxu0 %v330
      %670 = vmatprep.subr.mxu0 0.0
      %671 = vmatpush1.xpose.msra.mxu0 %v333
      %672 = vmatprep.subr.mxu0 0.0
      %673 = vmatpush1.xpose.msra.mxu0 %v336
      %674 = vmatprep.subr.mxu0 0.0
      %675 = vmatpush1.xpose.msra.mxu0 %v339
      %676 = vmatprep.subr.mxu0 0.0
      %677 = vmatpush1.xpose.msra.mxu0 %v342
      %678 = vmatprep.subr.mxu0 0.0
      %679 = vmatpush1.xpose.msra.mxu0 %v345
      %680 = vmatprep.subr.mxu0 0.0
      %681 = vmatpush1.xpose.msra.mxu0 %v348
      %682 = vmatprep.subr.mxu0 0.0
      %683 = vmatpush1.xpose.msra.mxu0 %v351
      %684 = vmatprep.subr.mxu0 0.0
      %685 = vmatpush1.xpose.msra.mxu0 %v354
      %686 = vmatprep.subr.mxu0 0.0
      %687 = vmatpush1.xpose.msra.mxu0 %v357
      %688 = vmatprep.subr.mxu0 0.0
      %689 = vmatpush1.xpose.msra.mxu0 %v360
      %690 = vmatprep.subr.mxu0 0.0
      %691 = vmatpush1.xpose.msra.mxu0 %v363
      %692 = vmatprep.mubr.f32.mxu0 0.0
      %693 = vmatmul.mubr.f32.gmra.mrb[0].mxu0 %v171
      %v694 = vpop.f32.mrb[0].mxu0
      %v695 = vadd.f32 0.0, %v694
      %v696 = vpop.f32.mrb[0].mxu0
      %v697 = vadd.f32 0.0, %v696
      %698 = vdwg.mxu0
      %699 = vmatprep.subr.mxu0 0.0
      %700 = vmatpush1.xpose.msra.mxu0 %v366
      %701 = vmatprep.subr.mxu0 0.0
      %702 = vmatpush1.xpose.msra.mxu0 %v369
      %703 = vmatprep.subr.mxu0 0.0
      %704 = vmatpush1.xpose.msra.mxu0 %v372
      %705 = vmatprep.subr.mxu0 0.0
      %706 = vmatpush1.xpose.msra.mxu0 %v375
      %707 = vmatprep.subr.mxu0 0.0
      %708 = vmatpush1.xpose.msra.mxu0 %v378
      %709 = vmatprep.subr.mxu0 0.0
      %710 = vmatpush1.xpose.msra.mxu0 %v381
      %711 = vmatprep.subr.mxu0 0.0
      %712 = vmatpush1.xpose.msra.mxu0 %v384
      %713 = vmatprep.subr.mxu0 0.0
      %714 = vmatpush1.xpose.msra.mxu0 %v387
      %715 = vmatprep.subr.mxu0 0.0
      %716 = vmatpush1.xpose.msra.mxu0 %v390
      %717 = vmatprep.subr.mxu0 0.0
      %718 = vmatpush1.xpose.msra.mxu0 %v393
      %719 = vmatprep.subr.mxu0 0.0
      %720 = vmatpush1.xpose.msra.mxu0 %v396
      %721 = vmatprep.subr.mxu0 0.0
      %722 = vmatpush1.xpose.msra.mxu0 %v399
      %723 = vmatprep.subr.mxu0 0.0
      %724 = vmatpush1.xpose.msra.mxu0 %v402
      %725 = vmatprep.subr.mxu0 0.0
      %726 = vmatpush1.xpose.msra.mxu0 %v405
      %727 = vmatprep.subr.mxu0 0.0
      %728 = vmatpush1.xpose.msra.mxu0 %v408
      %729 = vmatprep.subr.mxu0 0.0
      %730 = vmatpush1.xpose.msra.mxu0 %v411
      %731 = vmatprep.subr.mxu0 0.0
      %732 = vmatpush1.xpose.msra.mxu0 %v414
      %733 = vmatprep.subr.mxu0 0.0
      %734 = vmatpush1.xpose.msra.mxu0 %v417
      %735 = vmatprep.subr.mxu0 0.0
      %736 = vmatpush1.xpose.msra.mxu0 %v420
      %737 = vmatprep.subr.mxu0 0.0
      %738 = vmatpush1.xpose.msra.mxu0 %v423
      %739 = vmatprep.subr.mxu0 0.0
      %740 = vmatpush1.xpose.msra.mxu0 %v426
      %741 = vmatprep.subr.mxu0 0.0
      %742 = vmatpush1.xpose.msra.mxu0 %v429
      %743 = vmatprep.subr.mxu0 0.0
      %744 = vmatpush1.xpose.msra.mxu0 %v432
      %745 = vmatprep.subr.mxu0 0.0
      %746 = vmatpush1.xpose.msra.mxu0 %v435
      %747 = vmatprep.subr.mxu0 0.0
      %748 = vmatpush1.xpose.msra.mxu0 %v438
      %749 = vmatprep.subr.mxu0 0.0
      %750 = vmatpush1.xpose.msra.mxu0 %v441
      %751 = vmatprep.subr.mxu0 0.0
      %752 = vmatpush1.xpose.msra.mxu0 %v444
      %753 = vmatprep.subr.mxu0 0.0
      %754 = vmatpush1.xpose.msra.mxu0 %v447
      %755 = vmatprep.subr.mxu0 0.0
      %756 = vmatpush1.xpose.msra.mxu0 %v450
      %757 = vmatprep.subr.mxu0 0.0
      %758 = vmatpush1.xpose.msra.mxu0 %v453
      %759 = vmatprep.subr.mxu0 0.0
      %760 = vmatpush1.xpose.msra.mxu0 %v456
      %761 = vmatprep.subr.mxu0 0.0
      %762 = vmatpush1.xpose.msra.mxu0 %v459
      %763 = vmatprep.mubr.f32.mxu0 0.0
      %764 = vmatmul.mubr.f32.gmra.mrb[0].mxu0 %v171
      %v765 = vpop.f32.mrb[0].mxu0
      %v766 = vadd.f32 0.0, %v765
      %v767 = vpop.f32.mrb[0].mxu0
      %v768 = vadd.f32 0.0, %v767
      %769 = vdwg.mxu0
      %770 = vmatprep.subr.mxu0 0.0
      %771 = vmatpush1.xpose.msra.mxu0 %v462
      %772 = vmatprep.subr.mxu0 0.0
      %773 = vmatpush1.xpose.msra.mxu0 %v465
      %774 = vmatprep.subr.mxu0 0.0
      %775 = vmatpush1.xpose.msra.mxu0 %v468
      %776 = vmatprep.subr.mxu0 0.0
      %777 = vmatpush1.xpose.msra.mxu0 %v471
      %778 = vmatprep.subr.mxu0 0.0
      %779 = vmatpush1.xpose.msra.mxu0 %v474
      %780 = vmatprep.subr.mxu0 0.0
      %781 = vmatpush1.xpose.msra.mxu0 %v477
      %782 = vmatprep.subr.mxu0 0.0
      %783 = vmatpush1.xpose.msra.mxu0 %v480
      %784 = vmatprep.subr.mxu0 0.0
      %785 = vmatpush1.xpose.msra.mxu0 %v483
      %786 = vmatprep.subr.mxu0 0.0
      %787 = vmatpush1.xpose.msra.mxu0 %v486
      %788 = vmatprep.subr.mxu0 0.0
      %789 = vmatpush1.xpose.msra.mxu0 %v489
      %790 = vmatprep.subr.mxu0 0.0
      %791 = vmatpush1.xpose.msra.mxu0 %v492
      %792 = vmatprep.subr.mxu0 0.0
      %793 = vmatpush1.xpose.msra.mxu0 %v495
      %794 = vmatprep.subr.mxu0 0.0
      %795 = vmatpush1.xpose.msra.mxu0 %v498
      %796 = vmatprep.subr.mxu0 0.0
      %797 = vmatpush1.xpose.msra.mxu0 %v501
      %798 = vmatprep.subr.mxu0 0.0
      %799 = vmatpush1.xpose.msra.mxu0 %v504
      %800 = vmatprep.subr.mxu0 0.0
      %801 = vmatpush1.xpose.msra.mxu0 %v507
      %802 = vmatprep.subr.mxu0 0.0
      %803 = vmatpush1.xpose.msra.mxu0 %v510
      %804 = vmatprep.subr.mxu0 0.0
      %805 = vmatpush1.xpose.msra.mxu0 %v513
      %806 = vmatprep.subr.mxu0 0.0
      %807 = vmatpush1.xpose.msra.mxu0 %v516
      %808 = vmatprep.subr.mxu0 0.0
      %809 = vmatpush1.xpose.msra.mxu0 %v519
      %810 = vmatprep.subr.mxu0 0.0
      %811 = vmatpush1.xpose.msra.mxu0 %v522
      %812 = vmatprep.subr.mxu0 0.0
      %813 = vmatpush1.xpose.msra.mxu0 %v525
      %814 = vmatprep.subr.mxu0 0.0
      %815 = vmatpush1.xpose.msra.mxu0 %v528
      %816 = vmatprep.subr.mxu0 0.0
      %817 = vmatpush1.xpose.msra.mxu0 %v531
      %818 = vmatprep.subr.mxu0 0.0
      %819 = vmatpush1.xpose.msra.mxu0 %v534
      %820 = vmatprep.subr.mxu0 0.0
      %821 = vmatpush1.xpose.msra.mxu0 %v537
      %822 = vmatprep.subr.mxu0 0.0
      %823 = vmatpush1.xpose.msra.mxu0 %v540
      %824 = vmatprep.subr.mxu0 0.0
      %825 = vmatpush1.xpose.msra.mxu0 %v543
      %826 = vmatprep.subr.mxu0 0.0
      %827 = vmatpush1.xpose.msra.mxu0 %v546
      %828 = vmatprep.subr.mxu0 0.0
      %829 = vmatpush1.xpose.msra.mxu0 %v549
      %830 = vmatprep.subr.mxu0 0.0
      %831 = vmatpush1.xpose.msra.mxu0 %v552
      %832 = vmatprep.subr.mxu0 0.0
      %833 = vmatpush1.xpose.msra.mxu0 %v555
      %834 = vmatprep.mubr.f32.mxu0 0.0
      %835 = vmatmul.mubr.f32.gmra.mrb[0].mxu0 %v171
      %v836 = vpop.f32.mrb[0].mxu0
      %v837 = vadd.f32 0.0, %v836
      %v838 = vpop.f32.mrb[0].mxu0
      %v839 = vadd.f32 0.0, %v838
      %840 = vdwg.mxu0
      %v849 = vcombine.low %v624, %v626
      %v850 = vcombine.low %v695, %v697
      %v851 = vcombine.low %v766, %v768
      %v852 = vcombine.low %v837, %v839
      %857 = vst [vmem:[#allocation2] sm:$0xff] %v849
      %858 = vst [vmem:[#allocation2 + $0x8] sm:$0xff] %v850
      %859 = vst [vmem:[#allocation2 + $0x10] sm:$0xff] %v851
      %860 = vst [vmem:[#allocation2 + $0x18] sm:$0xff] %v852
      %v861 = vld [vmem:[%s3] sm:$0xf]
      %v862 = vld [vmem:[%s2] sm:$0xff]
      %v863 = vld [vmem:[%s2 + $0x8] sm:$0xff]
      %v864 = vld [vmem:[%s2 + $0x10] sm:$0xff]
      %v865 = vld [vmem:[%s2 + $0x18] sm:$0xff]
      %v866 = vld [vmem:[%s2 + $0x20] sm:$0xff]
      %v867 = vld [vmem:[%s2 + $0x28] sm:$0xff]
      %v868 = vld [vmem:[%s2 + $0x30] sm:$0xff]
      %v869 = vld [vmem:[%s2 + $0x38] sm:$0xff]
      %v870 = vld [vmem:[%s2 + $0x40] sm:$0xff]
      %v871 = vld [vmem:[%s2 + $0x48] sm:$0xff]
      %v872 = vld [vmem:[%s2 + $0x50] sm:$0xff]
      %v873 = vld [vmem:[%s2 + $0x58] sm:$0xff]
      %v874 = vld [vmem:[%s2 + $0x60] sm:$0xff]
      %v875 = vld [vmem:[%s2 + $0x68] sm:$0xff]
      %v876 = vld [vmem:[%s2 + $0x70] sm:$0xff]
      %v877 = vld [vmem:[%s2 + $0x78] sm:$0xff]
      %v878 = vld [vmem:[%s2 + $0x80] sm:$0xff]
      %v879 = vld [vmem:[%s2 + $0x88] sm:$0xff]
      %v880 = vld [vmem:[%s2 + $0x90] sm:$0xff]
      %v881 = vld [vmem:[%s2 + $0x98] sm:$0xff]
      %v882 = vld [vmem:[%s2 + $0xa0] sm:$0xff]
      %v883 = vld [vmem:[%s2 + $0xa8] sm:$0xff]
      %v884 = vld [vmem:[%s2 + $0xb0] sm:$0xff]
      %v885 = vld [vmem:[%s2 + $0xb8] sm:$0xff]
      %v886 = vld [vmem:[%s2 + $0xc0] sm:$0xff]
      %v887 = vld [vmem:[%s2 + $0xc8] sm:$0xff]
      %v888 = vld [vmem:[%s2 + $0xd0] sm:$0xff]
      %v889 = vld [vmem:[%s2 + $0xd8] sm:$0xff]
      %v890 = vld [vmem:[%s2 + $0xe0] sm:$0xff]
      %v891 = vld [vmem:[%s2 + $0xe8] sm:$0xff]
      %v892 = vld [vmem:[%s2 + $0xf0] sm:$0xff]
      %v893 = vld [vmem:[%s2 + $0xf8] sm:$0xff]
      %v894 = vld [vmem:[%s2 + $0x100] sm:$0xff]
      %v895 = vld [vmem:[%s2 + $0x108] sm:$0xff]
      %v896 = vld [vmem:[%s2 + $0x110] sm:$0xff]
      %v897 = vld [vmem:[%s2 + $0x118] sm:$0xff]
      %v898 = vld [vmem:[%s2 + $0x120] sm:$0xff]
      %v899 = vld [vmem:[%s2 + $0x128] sm:$0xff]
      %v900 = vld [vmem:[%s2 + $0x130] sm:$0xff]
      %v901 = vld [vmem:[%s2 + $0x138] sm:$0xff]
      %v902 = vld [vmem:[%s2 + $0x140] sm:$0xff]
      %v903 = vld [vmem:[%s2 + $0x148] sm:$0xff]
      %v904 = vld [vmem:[%s2 + $0x150] sm:$0xff]
      %v905 = vld [vmem:[%s2 + $0x158] sm:$0xff]
      %v906 = vld [vmem:[%s2 + $0x160] sm:$0xff]
      %v907 = vld [vmem:[%s2 + $0x168] sm:$0xff]
      %v908 = vld [vmem:[%s2 + $0x170] sm:$0xff]
      %v909 = vld [vmem:[%s2 + $0x178] sm:$0xff]
      %v910 = vld [vmem:[%s2 + $0x180] sm:$0xff]
      %v911 = vld [vmem:[%s2 + $0x188] sm:$0xff]
      %v912 = vld [vmem:[%s2 + $0x190] sm:$0xff]
      %v913 = vld [vmem:[%s2 + $0x198] sm:$0xff]
      %v914 = vld [vmem:[%s2 + $0x1a0] sm:$0xff]
      %v915 = vld [vmem:[%s2 + $0x1a8] sm:$0xff]
      %v916 = vld [vmem:[%s2 + $0x1b0] sm:$0xff]
      %v917 = vld [vmem:[%s2 + $0x1b8] sm:$0xff]
      %v918 = vld [vmem:[%s2 + $0x1c0] sm:$0xff]
      %v919 = vld [vmem:[%s2 + $0x1c8] sm:$0xff]
      %v920 = vld [vmem:[%s2 + $0x1d0] sm:$0xff]
      %v921 = vld [vmem:[%s2 + $0x1d8] sm:$0xff]
      %v922 = vld [vmem:[%s2 + $0x1e0] sm:$0xff]
      %v923 = vld [vmem:[%s2 + $0x1e8] sm:$0xff]
      %v924 = vld [vmem:[%s2 + $0x1f0] sm:$0xff]
      %v925 = vld [vmem:[%s2 + $0x1f8] sm:$0xff]
      %v926 = vld [vmem:[%s2 + $0x200] sm:$0xff]
      %v927 = vld [vmem:[%s2 + $0x208] sm:$0xff]
      %v928 = vld [vmem:[%s2 + $0x210] sm:$0xff]
      %v929 = vld [vmem:[%s2 + $0x218] sm:$0xff]
      %v930 = vld [vmem:[%s2 + $0x220] sm:$0xff]
      %v931 = vld [vmem:[%s2 + $0x228] sm:$0xff]
      %v932 = vld [vmem:[%s2 + $0x230] sm:$0xff]
      %v933 = vld [vmem:[%s2 + $0x238] sm:$0xff]
      %v934 = vld [vmem:[%s2 + $0x240] sm:$0xff]
      %v935 = vld [vmem:[%s2 + $0x248] sm:$0xff]
      %v936 = vld [vmem:[%s2 + $0x250] sm:$0xff]
      %v937 = vld [vmem:[%s2 + $0x258] sm:$0xff]
      %v938 = vld [vmem:[%s2 + $0x260] sm:$0xff]
      %v939 = vld [vmem:[%s2 + $0x268] sm:$0xff]
      %v940 = vld [vmem:[%s2 + $0x270] sm:$0xff]
      %v941 = vld [vmem:[%s2 + $0x278] sm:$0xff]
      %v942 = vld [vmem:[%s2 + $0x280] sm:$0xff]
      %v943 = vld [vmem:[%s2 + $0x288] sm:$0xff]
      %v944 = vld [vmem:[%s2 + $0x290] sm:$0xff]
      %v945 = vld [vmem:[%s2 + $0x298] sm:$0xff]
      %v946 = vld [vmem:[%s2 + $0x2a0] sm:$0xff]
      %v947 = vld [vmem:[%s2 + $0x2a8] sm:$0xff]
      %v948 = vld [vmem:[%s2 + $0x2b0] sm:$0xff]
      %v949 = vld [vmem:[%s2 + $0x2b8] sm:$0xff]
      %v950 = vld [vmem:[%s2 + $0x2c0] sm:$0xff]
      %v951 = vld [vmem:[%s2 + $0x2c8] sm:$0xff]
      %v952 = vld [vmem:[%s2 + $0x2d0] sm:$0xff]
      %v953 = vld [vmem:[%s2 + $0x2d8] sm:$0xff]
      %v954 = vld [vmem:[%s2 + $0x2e0] sm:$0xff]
      %v955 = vld [vmem:[%s2 + $0x2e8] sm:$0xff]
      %v956 = vld [vmem:[%s2 + $0x2f0] sm:$0xff]
      %v957 = vld [vmem:[%s2 + $0x2f8] sm:$0xff]
      %v958 = vld [vmem:[%s2 + $0x300] sm:$0xff]
      %v959 = vld [vmem:[%s2 + $0x308] sm:$0xff]
      %v960 = vld [vmem:[%s2 + $0x310] sm:$0xff]
      %v961 = vld [vmem:[%s2 + $0x318] sm:$0xff]
      %v962 = vld [vmem:[%s2 + $0x320] sm:$0xff]
      %v963 = vld [vmem:[%s2 + $0x328] sm:$0xff]
      %v964 = vld [vmem:[%s2 + $0x330] sm:$0xff]
      %v965 = vld [vmem:[%s2 + $0x338] sm:$0xff]
      %v966 = vld [vmem:[%s2 + $0x340] sm:$0xff]
      %v967 = vld [vmem:[%s2 + $0x348] sm:$0xff]
      %v968 = vld [vmem:[%s2 + $0x350] sm:$0xff]
      %v969 = vld [vmem:[%s2 + $0x358] sm:$0xff]
      %v970 = vld [vmem:[%s2 + $0x360] sm:$0xff]
      %v971 = vld [vmem:[%s2 + $0x368] sm:$0xff]
      %v972 = vld [vmem:[%s2 + $0x370] sm:$0xff]
      %v973 = vld [vmem:[%s2 + $0x378] sm:$0xff]
      %v974 = vld [vmem:[%s2 + $0x380] sm:$0xff]
      %v975 = vld [vmem:[%s2 + $0x388] sm:$0xff]
      %v976 = vld [vmem:[%s2 + $0x390] sm:$0xff]
      %v977 = vld [vmem:[%s2 + $0x398] sm:$0xff]
      %v978 = vld [vmem:[%s2 + $0x3a0] sm:$0xff]
      %v979 = vld [vmem:[%s2 + $0x3a8] sm:$0xff]
      %v980 = vld [vmem:[%s2 + $0x3b0] sm:$0xff]
      %v981 = vld [vmem:[%s2 + $0x3b8] sm:$0xff]
      %v982 = vld [vmem:[%s2 + $0x3c0] sm:$0xff]
      %v983 = vld [vmem:[%s2 + $0x3c8] sm:$0xff]
      %v984 = vld [vmem:[%s2 + $0x3d0] sm:$0xff]
      %v985 = vld [vmem:[%s2 + $0x3d8] sm:$0xff]
      %v986 = vld [vmem:[%s2 + $0x3e0] sm:$0xff]
      %v987 = vld [vmem:[%s2 + $0x3e8] sm:$0xff]
      %v988 = vld [vmem:[%s2 + $0x3f0] sm:$0xff]
      %v989 = vld [vmem:[%s2 + $0x3f8] sm:$0xff]
      %v991 = vsel %vm169, %v861, 0
      %v994 = vsel %vm169, %v862, 0
      %v997 = vsel %vm169, %v863, 0
      %v1000 = vsel %vm169, %v864, 0
      %v1003 = vsel %vm169, %v865, 0
      %v1006 = vsel %vm169, %v866, 0
      %v1009 = vsel %vm169, %v867, 0
      %v1012 = vsel %vm169, %v868, 0
      %v1015 = vsel %vm169, %v869, 0
      %v1018 = vsel %vm169, %v870, 0
      %v1021 = vsel %vm169, %v871, 0
      %v1024 = vsel %vm169, %v872, 0
      %v1027 = vsel %vm169, %v873, 0
      %v1030 = vsel %vm169, %v874, 0
      %v1033 = vsel %vm169, %v875, 0
      %v1036 = vsel %vm169, %v876, 0
      %v1039 = vsel %vm169, %v877, 0
      %v1042 = vsel %vm169, %v878, 0
      %v1045 = vsel %vm169, %v879, 0
      %v1048 = vsel %vm169, %v880, 0
      %v1051 = vsel %vm169, %v881, 0
      %v1054 = vsel %vm169, %v882, 0
      %v1057 = vsel %vm169, %v883, 0
      %v1060 = vsel %vm169, %v884, 0
      %v1063 = vsel %vm169, %v885, 0
      %v1066 = vsel %vm169, %v886, 0
      %v1069 = vsel %vm169, %v887, 0
      %v1072 = vsel %vm169, %v888, 0
      %v1075 = vsel %vm169, %v889, 0
      %v1078 = vsel %vm169, %v890, 0
      %v1081 = vsel %vm169, %v891, 0
      %v1084 = vsel %vm169, %v892, 0
      %v1087 = vsel %vm169, %v893, 0
      %v1090 = vsel %vm169, %v894, 0
      %v1093 = vsel %vm169, %v895, 0
      %v1096 = vsel %vm169, %v896, 0
      %v1099 = vsel %vm169, %v897, 0
      %v1102 = vsel %vm169, %v898, 0
      %v1105 = vsel %vm169, %v899, 0
      %v1108 = vsel %vm169, %v900, 0
      %v1111 = vsel %vm169, %v901, 0
      %v1114 = vsel %vm169, %v902, 0
      %v1117 = vsel %vm169, %v903, 0
      %v1120 = vsel %vm169, %v904, 0
      %v1123 = vsel %vm169, %v905, 0
      %v1126 = vsel %vm169, %v906, 0
      %v1129 = vsel %vm169, %v907, 0
      %v1132 = vsel %vm169, %v908, 0
      %v1135 = vsel %vm169, %v909, 0
      %v1138 = vsel %vm169, %v910, 0
      %v1141 = vsel %vm169, %v911, 0
      %v1144 = vsel %vm169, %v912, 0
      %v1147 = vsel %vm169, %v913, 0
      %v1150 = vsel %vm169, %v914, 0
      %v1153 = vsel %vm169, %v915, 0
      %v1156 = vsel %vm169, %v916, 0
      %v1159 = vsel %vm169, %v917, 0
      %v1162 = vsel %vm169, %v918, 0
      %v1165 = vsel %vm169, %v919, 0
      %v1168 = vsel %vm169, %v920, 0
      %v1171 = vsel %vm169, %v921, 0
      %v1174 = vsel %vm169, %v922, 0
      %v1177 = vsel %vm169, %v923, 0
      %v1180 = vsel %vm169, %v924, 0
      %v1183 = vsel %vm169, %v925, 0
      %v1186 = vsel %vm169, %v926, 0
      %v1189 = vsel %vm169, %v927, 0
      %v1192 = vsel %vm169, %v928, 0
      %v1195 = vsel %vm169, %v929, 0
      %v1198 = vsel %vm169, %v930, 0
      %v1201 = vsel %vm169, %v931, 0
      %v1204 = vsel %vm169, %v932, 0
      %v1207 = vsel %vm169, %v933, 0
      %v1210 = vsel %vm169, %v934, 0
      %v1213 = vsel %vm169, %v935, 0
      %v1216 = vsel %vm169, %v936, 0
      %v1219 = vsel %vm169, %v937, 0
      %v1222 = vsel %vm169, %v938, 0
      %v1225 = vsel %vm169, %v939, 0
      %v1228 = vsel %vm169, %v940, 0
      %v1231 = vsel %vm169, %v941, 0
      %v1234 = vsel %vm169, %v942, 0
      %v1237 = vsel %vm169, %v943, 0
      %v1240 = vsel %vm169, %v944, 0
      %v1243 = vsel %vm169, %v945, 0
      %v1246 = vsel %vm169, %v946, 0
      %v1249 = vsel %vm169, %v947, 0
      %v1252 = vsel %vm169, %v948, 0
      %v1255 = vsel %vm169, %v949, 0
      %v1258 = vsel %vm169, %v950, 0
      %v1261 = vsel %vm169, %v951, 0
      %v1264 = vsel %vm169, %v952, 0
      %v1267 = vsel %vm169, %v953, 0
      %v1270 = vsel %vm169, %v954, 0
      %v1273 = vsel %vm169, %v955, 0
      %v1276 = vsel %vm169, %v956, 0
      %v1279 = vsel %vm169, %v957, 0
      %v1282 = vsel %vm169, %v958, 0
      %v1285 = vsel %vm169, %v959, 0
      %v1288 = vsel %vm169, %v960, 0
      %v1291 = vsel %vm169, %v961, 0
      %v1294 = vsel %vm169, %v962, 0
      %v1297 = vsel %vm169, %v963, 0
      %v1300 = vsel %vm169, %v964, 0
      %v1303 = vsel %vm169, %v965, 0
      %v1306 = vsel %vm169, %v966, 0
      %v1309 = vsel %vm169, %v967, 0
      %v1312 = vsel %vm169, %v968, 0
      %v1315 = vsel %vm169, %v969, 0
      %v1318 = vsel %vm169, %v970, 0
      %v1321 = vsel %vm169, %v971, 0
      %v1324 = vsel %vm169, %v972, 0
      %v1327 = vsel %vm169, %v973, 0
      %v1330 = vsel %vm169, %v974, 0
      %v1333 = vsel %vm169, %v975, 0
      %v1336 = vsel %vm169, %v976, 0
      %v1339 = vsel %vm169, %v977, 0
      %v1342 = vsel %vm169, %v978, 0
      %v1345 = vsel %vm169, %v979, 0
      %v1348 = vsel %vm169, %v980, 0
      %v1351 = vsel %vm169, %v981, 0
      %v1354 = vsel %vm169, %v982, 0
      %v1357 = vsel %vm169, %v983, 0
      %v1360 = vsel %vm169, %v984, 0
      %v1363 = vsel %vm169, %v985, 0
      %v1366 = vsel %vm169, %v986, 0
      %v1369 = vsel %vm169, %v987, 0
      %v1372 = vsel %vm169, %v988, 0
      %v1375 = vsel %vm169, %v989, 0
      %1377 = vmatprep.subr.mxu0 0.0
      %1378 = vmatpush1.xpose.msra.mxu0 %v994
      %1379 = vmatprep.subr.mxu0 0.0
      %1380 = vmatpush1.xpose.msra.mxu0 %v997
      %1381 = vmatprep.subr.mxu0 0.0
      %1382 = vmatpush1.xpose.msra.mxu0 %v1000
      %1383 = vmatprep.subr.mxu0 0.0
      %1384 = vmatpush1.xpose.msra.mxu0 %v1003
      %1385 = vmatprep.subr.mxu0 0.0
      %1386 = vmatpush1.xpose.msra.mxu0 %v1006
      %1387 = vmatprep.subr.mxu0 0.0
      %1388 = vmatpush1.xpose.msra.mxu0 %v1009
      %1389 = vmatprep.subr.mxu0 0.0
      %1390 = vmatpush1.xpose.msra.mxu0 %v1012
      %1391 = vmatprep.subr.mxu0 0.0
      %1392 = vmatpush1.xpose.msra.mxu0 %v1015
      %1393 = vmatprep.subr.mxu0 0.0
      %1394 = vmatpush1.xpose.msra.mxu0 %v1018
      %1395 = vmatprep.subr.mxu0 0.0
      %1396 = vmatpush1.xpose.msra.mxu0 %v1021
      %1397 = vmatprep.subr.mxu0 0.0
      %1398 = vmatpush1.xpose.msra.mxu0 %v1024
      %1399 = vmatprep.subr.mxu0 0.0
      %1400 = vmatpush1.xpose.msra.mxu0 %v1027
      %1401 = vmatprep.subr.mxu0 0.0
      %1402 = vmatpush1.xpose.msra.mxu0 %v1030
      %1403 = vmatprep.subr.mxu0 0.0
      %1404 = vmatpush1.xpose.msra.mxu0 %v1033
      %1405 = vmatprep.subr.mxu0 0.0
      %1406 = vmatpush1.xpose.msra.mxu0 %v1036
      %1407 = vmatprep.subr.mxu0 0.0
      %1408 = vmatpush1.xpose.msra.mxu0 %v1039
      %1409 = vmatprep.subr.mxu0 0.0
      %1410 = vmatpush1.xpose.msra.mxu0 %v1042
      %1411 = vmatprep.subr.mxu0 0.0
      %1412 = vmatpush1.xpose.msra.mxu0 %v1045
      %1413 = vmatprep.subr.mxu0 0.0
      %1414 = vmatpush1.xpose.msra.mxu0 %v1048
      %1415 = vmatprep.subr.mxu0 0.0
      %1416 = vmatpush1.xpose.msra.mxu0 %v1051
      %1417 = vmatprep.subr.mxu0 0.0
      %1418 = vmatpush1.xpose.msra.mxu0 %v1054
      %1419 = vmatprep.subr.mxu0 0.0
      %1420 = vmatpush1.xpose.msra.mxu0 %v1057
      %1421 = vmatprep.subr.mxu0 0.0
      %1422 = vmatpush1.xpose.msra.mxu0 %v1060
      %1423 = vmatprep.subr.mxu0 0.0
      %1424 = vmatpush1.xpose.msra.mxu0 %v1063
      %1425 = vmatprep.subr.mxu0 0.0
      %1426 = vmatpush1.xpose.msra.mxu0 %v1066
      %1427 = vmatprep.subr.mxu0 0.0
      %1428 = vmatpush1.xpose.msra.mxu0 %v1069
      %1429 = vmatprep.subr.mxu0 0.0
      %1430 = vmatpush1.xpose.msra.mxu0 %v1072
      %1431 = vmatprep.subr.mxu0 0.0
      %1432 = vmatpush1.xpose.msra.mxu0 %v1075
      %1433 = vmatprep.subr.mxu0 0.0
      %1434 = vmatpush1.xpose.msra.mxu0 %v1078
      %1435 = vmatprep.subr.mxu0 0.0
      %1436 = vmatpush1.xpose.msra.mxu0 %v1081
      %1437 = vmatprep.subr.mxu0 0.0
      %1438 = vmatpush1.xpose.msra.mxu0 %v1084
      %1439 = vmatprep.subr.mxu0 0.0
      %1440 = vmatpush1.xpose.msra.mxu0 %v1087
      %1441 = vmatprep.mubr.f32.mxu0 0.0
      %1442 = vmatmul.mubr.f32.gmra.mrb[0].mxu0 %v991
      %v1443 = vpop.f32.mrb[0].mxu0
      %v1444 = vadd.f32 0.0, %v1443
      %v1445 = vpop.f32.mrb[0].mxu0
      %v1446 = vadd.f32 0.0, %v1445
      %1447 = vdwg.mxu0
      %1448 = vmatprep.subr.mxu0 0.0
      %1449 = vmatpush1.xpose.msra.mxu0 %v1090
      %1450 = vmatprep.subr.mxu0 0.0
      %1451 = vmatpush1.xpose.msra.mxu0 %v1093
      %1452 = vmatprep.subr.mxu0 0.0
      %1453 = vmatpush1.xpose.msra.mxu0 %v1096
      %1454 = vmatprep.subr.mxu0 0.0
      %1455 = vmatpush1.xpose.msra.mxu0 %v1099
      %1456 = vmatprep.subr.mxu0 0.0
      %1457 = vmatpush1.xpose.msra.mxu0 %v1102
      %1458 = vmatprep.subr.mxu0 0.0
      %1459 = vmatpush1.xpose.msra.mxu0 %v1105
      %1460 = vmatprep.subr.mxu0 0.0
      %1461 = vmatpush1.xpose.msra.mxu0 %v1108
      %1462 = vmatprep.subr.mxu0 0.0
      %1463 = vmatpush1.xpose.msra.mxu0 %v1111
      %1464 = vmatprep.subr.mxu0 0.0
      %1465 = vmatpush1.xpose.msra.mxu0 %v1114
      %1466 = vmatprep.subr.mxu0 0.0
      %1467 = vmatpush1.xpose.msra.mxu0 %v1117
      %1468 = vmatprep.subr.mxu0 0.0
      %1469 = vmatpush1.xpose.msra.mxu0 %v1120
      %1470 = vmatprep.subr.mxu0 0.0
      %1471 = vmatpush1.xpose.msra.mxu0 %v1123
      %1472 = vmatprep.subr.mxu0 0.0
      %1473 = vmatpush1.xpose.msra.mxu0 %v1126
      %1474 = vmatprep.subr.mxu0 0.0
      %1475 = vmatpush1.xpose.msra.mxu0 %v1129
      %1476 = vmatprep.subr.mxu0 0.0
      %1477 = vmatpush1.xpose.msra.mxu0 %v1132
      %1478 = vmatprep.subr.mxu0 0.0
      %1479 = vmatpush1.xpose.msra.mxu0 %v1135
      %1480 = vmatprep.subr.mxu0 0.0
      %1481 = vmatpush1.xpose.msra.mxu0 %v1138
      %1482 = vmatprep.subr.mxu0 0.0
      %1483 = vmatpush1.xpose.msra.mxu0 %v1141
      %1484 = vmatprep.subr.mxu0 0.0
      %1485 = vmatpush1.xpose.msra.mxu0 %v1144
      %1486 = vmatprep.subr.mxu0 0.0
      %1487 = vmatpush1.xpose.msra.mxu0 %v1147
      %1488 = vmatprep.subr.mxu0 0.0
      %1489 = vmatpush1.xpose.msra.mxu0 %v1150
      %1490 = vmatprep.subr.mxu0 0.0
      %1491 = vmatpush1.xpose.msra.mxu0 %v1153
      %1492 = vmatprep.subr.mxu0 0.0
      %1493 = vmatpush1.xpose.msra.mxu0 %v1156
      %1494 = vmatprep.subr.mxu0 0.0
      %1495 = vmatpush1.xpose.msra.mxu0 %v1159
      %1496 = vmatprep.subr.mxu0 0.0
      %1497 = vmatpush1.xpose.msra.mxu0 %v1162
      %1498 = vmatprep.subr.mxu0 0.0
      %1499 = vmatpush1.xpose.msra.mxu0 %v1165
      %1500 = vmatprep.subr.mxu0 0.0
      %1501 = vmatpush1.xpose.msra.mxu0 %v1168
      %1502 = vmatprep.subr.mxu0 0.0
      %1503 = vmatpush1.xpose.msra.mxu0 %v1171
      %1504 = vmatprep.subr.mxu0 0.0
      %1505 = vmatpush1.xpose.msra.mxu0 %v1174
      %1506 = vmatprep.subr.mxu0 0.0
      %1507 = vmatpush1.xpose.msra.mxu0 %v1177
      %1508 = vmatprep.subr.mxu0 0.0
      %1509 = vmatpush1.xpose.msra.mxu0 %v1180
      %1510 = vmatprep.subr.mxu0 0.0
      %1511 = vmatpush1.xpose.msra.mxu0 %v1183
      %1512 = vmatprep.mubr.f32.mxu0 0.0
      %1513 = vmatmul.mubr.f32.gmra.mrb[0].mxu0 %v991
      %v1514 = vpop.f32.mrb[0].mxu0
      %v1515 = vadd.f32 0.0, %v1514
      %v1516 = vpop.f32.mrb[0].mxu0
      %v1517 = vadd.f32 0.0, %v1516
      %1518 = vdwg.mxu0
      %1519 = vmatprep.subr.mxu0 0.0
      %1520 = vmatpush1.xpose.msra.mxu0 %v1186
      %1521 = vmatprep.subr.mxu0 0.0
      %1522 = vmatpush1.xpose.msra.mxu0 %v1189
      %1523 = vmatprep.subr.mxu0 0.0
      %1524 = vmatpush1.xpose.msra.mxu0 %v1192
      %1525 = vmatprep.subr.mxu0 0.0
      %1526 = vmatpush1.xpose.msra.mxu0 %v1195
      %1527 = vmatprep.subr.mxu0 0.0
      %1528 = vmatpush1.xpose.msra.mxu0 %v1198
      %1529 = vmatprep.subr.mxu0 0.0
      %1530 = vmatpush1.xpose.msra.mxu0 %v1201
      %1531 = vmatprep.subr.mxu0 0.0
      %1532 = vmatpush1.xpose.msra.mxu0 %v1204
      %1533 = vmatprep.subr.mxu0 0.0
      %1534 = vmatpush1.xpose.msra.mxu0 %v1207
      %1535 = vmatprep.subr.mxu0 0.0
      %1536 = vmatpush1.xpose.msra.mxu0 %v1210
      %1537 = vmatprep.subr.mxu0 0.0
      %1538 = vmatpush1.xpose.msra.mxu0 %v1213
      %1539 = vmatprep.subr.mxu0 0.0
      %1540 = vmatpush1.xpose.msra.mxu0 %v1216
      %1541 = vmatprep.subr.mxu0 0.0
      %1542 = vmatpush1.xpose.msra.mxu0 %v1219
      %1543 = vmatprep.subr.mxu0 0.0
      %1544 = vmatpush1.xpose.msra.mxu0 %v1222
      %1545 = vmatprep.subr.mxu0 0.0
      %1546 = vmatpush1.xpose.msra.mxu0 %v1225
      %1547 = vmatprep.subr.mxu0 0.0
      %1548 = vmatpush1.xpose.msra.mxu0 %v1228
      %1549 = vmatprep.subr.mxu0 0.0
      %1550 = vmatpush1.xpose.msra.mxu0 %v1231
      %1551 = vmatprep.subr.mxu0 0.0
      %1552 = vmatpush1.xpose.msra.mxu0 %v1234
      %1553 = vmatprep.subr.mxu0 0.0
      %1554 = vmatpush1.xpose.msra.mxu0 %v1237
      %1555 = vmatprep.subr.mxu0 0.0
      %1556 = vmatpush1.xpose.msra.mxu0 %v1240
      %1557 = vmatprep.subr.mxu0 0.0
      %1558 = vmatpush1.xpose.msra.mxu0 %v1243
      %1559 = vmatprep.subr.mxu0 0.0
      %1560 = vmatpush1.xpose.msra.mxu0 %v1246
      %1561 = vmatprep.subr.mxu0 0.0
      %1562 = vmatpush1.xpose.msra.mxu0 %v1249
      %1563 = vmatprep.subr.mxu0 0.0
      %1564 = vmatpush1.xpose.msra.mxu0 %v1252
      %1565 = vmatprep.subr.mxu0 0.0
      %1566 = vmatpush1.xpose.msra.mxu0 %v1255
      %1567 = vmatprep.subr.mxu0 0.0
      %1568 = vmatpush1.xpose.msra.mxu0 %v1258
      %1569 = vmatprep.subr.mxu0 0.0
      %1570 = vmatpush1.xpose.msra.mxu0 %v1261
      %1571 = vmatprep.subr.mxu0 0.0
      %1572 = vmatpush1.xpose.msra.mxu0 %v1264
      %1573 = vmatprep.subr.mxu0 0.0
      %1574 = vmatpush1.xpose.msra.mxu0 %v1267
      %1575 = vmatprep.subr.mxu0 0.0
      %1576 = vmatpush1.xpose.msra.mxu0 %v1270
      %1577 = vmatprep.subr.mxu0 0.0
      %1578 = vmatpush1.xpose.msra.mxu0 %v1273
      %1579 = vmatprep.subr.mxu0 0.0
      %1580 = vmatpush1.xpose.msra.mxu0 %v1276
      %1581 = vmatprep.subr.mxu0 0.0
      %1582 = vmatpush1.xpose.msra.mxu0 %v1279
      %1583 = vmatprep.mubr.f32.mxu0 0.0
      %1584 = vmatmul.mubr.f32.gmra.mrb[0].mxu0 %v991
      %v1585 = vpop.f32.mrb[0].mxu0
      %v1586 = vadd.f32 0.0, %v1585
      %v1587 = vpop.f32.mrb[0].mxu0
      %v1588 = vadd.f32 0.0, %v1587
      %1589 = vdwg.mxu0
      %1590 = vmatprep.subr.mxu0 0.0
      %1591 = vmatpush1.xpose.msra.mxu0 %v1282
      %1592 = vmatprep.subr.mxu0 0.0
      %1593 = vmatpush1.xpose.msra.mxu0 %v1285
      %1594 = vmatprep.subr.mxu0 0.0
      %1595 = vmatpush1.xpose.msra.mxu0 %v1288
      %1596 = vmatprep.subr.mxu0 0.0
      %1597 = vmatpush1.xpose.msra.mxu0 %v1291
      %1598 = vmatprep.subr.mxu0 0.0
      %1599 = vmatpush1.xpose.msra.mxu0 %v1294
      %1600 = vmatprep.subr.mxu0 0.0
      %1601 = vmatpush1.xpose.msra.mxu0 %v1297
      %1602 = vmatprep.subr.mxu0 0.0
      %1603 = vmatpush1.xpose.msra.mxu0 %v1300
      %1604 = vmatprep.subr.mxu0 0.0
      %1605 = vmatpush1.xpose.msra.mxu0 %v1303
      %1606 = vmatprep.subr.mxu0 0.0
      %1607 = vmatpush1.xpose.msra.mxu0 %v1306
      %1608 = vmatprep.subr.mxu0 0.0
      %1609 = vmatpush1.xpose.msra.mxu0 %v1309
      %1610 = vmatprep.subr.mxu0 0.0
      %1611 = vmatpush1.xpose.msra.mxu0 %v1312
      %1612 = vmatprep.subr.mxu0 0.0
      %1613 = vmatpush1.xpose.msra.mxu0 %v1315
      %1614 = vmatprep.subr.mxu0 0.0
      %1615 = vmatpush1.xpose.msra.mxu0 %v1318
      %1616 = vmatprep.subr.mxu0 0.0
      %1617 = vmatpush1.xpose.msra.mxu0 %v1321
      %1618 = vmatprep.subr.mxu0 0.0
      %1619 = vmatpush1.xpose.msra.mxu0 %v1324
      %1620 = vmatprep.subr.mxu0 0.0
      %1621 = vmatpush1.xpose.msra.mxu0 %v1327
      %1622 = vmatprep.subr.mxu0 0.0
      %1623 = vmatpush1.xpose.msra.mxu0 %v1330
      %1624 = vmatprep.subr.mxu0 0.0
      %1625 = vmatpush1.xpose.msra.mxu0 %v1333
      %1626 = vmatprep.subr.mxu0 0.0
      %1627 = vmatpush1.xpose.msra.mxu0 %v1336
      %1628 = vmatprep.subr.mxu0 0.0
      %1629 = vmatpush1.xpose.msra.mxu0 %v1339
      %1630 = vmatprep.subr.mxu0 0.0
      %1631 = vmatpush1.xpose.msra.mxu0 %v1342
      %1632 = vmatprep.subr.mxu0 0.0
      %1633 = vmatpush1.xpose.msra.mxu0 %v1345
      %1634 = vmatprep.subr.mxu0 0.0
      %1635 = vmatpush1.xpose.msra.mxu0 %v1348
      %1636 = vmatprep.subr.mxu0 0.0
      %1637 = vmatpush1.xpose.msra.mxu0 %v1351
      %1638 = vmatprep.subr.mxu0 0.0
      %1639 = vmatpush1.xpose.msra.mxu0 %v1354
      %1640 = vmatprep.subr.mxu0 0.0
      %1641 = vmatpush1.xpose.msra.mxu0 %v1357
      %1642 = vmatprep.subr.mxu0 0.0
      %1643 = vmatpush1.xpose.msra.mxu0 %v1360
      %1644 = vmatprep.subr.mxu0 0.0
      %1645 = vmatpush1.xpose.msra.mxu0 %v1363
      %1646 = vmatprep.subr.mxu0 0.0
      %1647 = vmatpush1.xpose.msra.mxu0 %v1366
      %1648 = vmatprep.subr.mxu0 0.0
      %1649 = vmatpush1.xpose.msra.mxu0 %v1369
      %1650 = vmatprep.subr.mxu0 0.0
      %1651 = vmatpush1.xpose.msra.mxu0 %v1372
      %1652 = vmatprep.subr.mxu0 0.0
      %1653 = vmatpush1.xpose.msra.mxu0 %v1375
      %1654 = vmatprep.mubr.f32.mxu0 0.0
      %1655 = vmatmul.mubr.f32.gmra.mrb[0].mxu0 %v991
      %v1656 = vpop.f32.mrb[0].mxu0
      %v1657 = vadd.f32 0.0, %v1656
      %v1658 = vpop.f32.mrb[0].mxu0
      %v1659 = vadd.f32 0.0, %v1658
      %1660 = vdwg.mxu0
      %v1669 = vcombine.low %v1444, %v1446
      %v1670 = vcombine.low %v1515, %v1517
      %v1671 = vcombine.low %v1586, %v1588
      %v1672 = vcombine.low %v1657, %v1659
      %1677 = vst [vmem:[#allocation3] sm:$0xff] %v1669
      %1678 = vst [vmem:[#allocation3 + $0x8] sm:$0xff] %v1670
      %1679 = vst [vmem:[#allocation3 + $0x10] sm:$0xff] %v1671
      %1680 = vst [vmem:[#allocation3 + $0x18] sm:$0xff] %v1672
    $region41: #{recurrent_gcn_forward_seq.1} parent=1 // pred_fallthru
      _
    %v1681 = vld [vmem:[%s4] sm:$0xff]
    %v1682 = vld [vmem:[%s4 + $0x8] sm:$0xff]
    %v1683 = vld [vmem:[%s0] sm:$0xff]
    %v1684 = vld [vmem:[%s0 + $0x8] sm:$0xff]
    %v1685 = vld [vmem:[%s0 + $0x10] sm:$0xff]
    %v1686 = vld [vmem:[%s0 + $0x18] sm:$0xff]
    %v1687 = vld [vmem:[%s0 + $0x20] sm:$0xff]
    %v1688 = vld [vmem:[%s0 + $0x28] sm:$0xff]
    %v1689 = vld [vmem:[%s0 + $0x30] sm:$0xff]
    %v1690 = vld [vmem:[%s0 + $0x38] sm:$0xff]
    %v1691 = vld [vmem:[%s0 + $0x40] sm:$0xff]
    %v1692 = vld [vmem:[%s0 + $0x48] sm:$0xff]
    %v1693 = vld [vmem:[%s0 + $0x50] sm:$0xff]
    %v1694 = vld [vmem:[%s0 + $0x58] sm:$0xff]
    %v1695 = vld [vmem:[%s0 + $0x60] sm:$0xff]
    %v1696 = vld [vmem:[%s0 + $0x68] sm:$0xff]
    %v1697 = vld [vmem:[%s0 + $0x70] sm:$0xff]
    %v1698 = vld [vmem:[%s0 + $0x78] sm:$0xff]
    %v1699 = vld [vmem:[%s0 + $0x80] sm:$0xff]
    %v1700 = vld [vmem:[%s0 + $0x88] sm:$0xff]
    %v1701 = vld [vmem:[%s0 + $0x90] sm:$0xff]
    %v1702 = vld [vmem:[%s0 + $0x98] sm:$0xff]
    %v1703 = vld [vmem:[%s0 + $0xa0] sm:$0xff]
    %v1704 = vld [vmem:[%s0 + $0xa8] sm:$0xff]
    %v1705 = vld [vmem:[%s0 + $0xb0] sm:$0xff]
    %v1706 = vld [vmem:[%s0 + $0xb8] sm:$0xff]
    %v1707 = vld [vmem:[%s0 + $0xc0] sm:$0xff]
    %v1708 = vld [vmem:[%s0 + $0xc8] sm:$0xff]
    %v1709 = vld [vmem:[%s0 + $0xd0] sm:$0xff]
    %v1710 = vld [vmem:[%s0 + $0xd8] sm:$0xff]
    %v1711 = vld [vmem:[%s0 + $0xe0] sm:$0xff]
    %v1712 = vld [vmem:[%s0 + $0xe8] sm:$0xff]
    %v1713 = vld [vmem:[%s0 + $0xf0] sm:$0xff]
    %v1714 = vld [vmem:[%s0 + $0xf8] sm:$0xff]
    %v1715 = vld [vmem:[%s0 + $0x100] sm:$0xff]
    %v1716 = vld [vmem:[%s0 + $0x108] sm:$0xff]
    %v1717 = vld [vmem:[%s0 + $0x110] sm:$0xff]
    %v1718 = vld [vmem:[%s0 + $0x118] sm:$0xff]
    %v1719 = vld [vmem:[%s0 + $0x120] sm:$0xff]
    %v1720 = vld [vmem:[%s0 + $0x128] sm:$0xff]
    %v1721 = vld [vmem:[%s0 + $0x130] sm:$0xff]
    %v1722 = vld [vmem:[%s0 + $0x138] sm:$0xff]
    %v1723 = vld [vmem:[%s0 + $0x140] sm:$0xff]
    %v1724 = vld [vmem:[%s0 + $0x148] sm:$0xff]
    %v1725 = vld [vmem:[%s0 + $0x150] sm:$0xff]
    %v1726 = vld [vmem:[%s0 + $0x158] sm:$0xff]
    %v1727 = vld [vmem:[%s0 + $0x160] sm:$0xff]
    %v1728 = vld [vmem:[%s0 + $0x168] sm:$0xff]
    %v1729 = vld [vmem:[%s0 + $0x170] sm:$0xff]
    %v1730 = vld [vmem:[%s0 + $0x178] sm:$0xff]
    %v1731 = vld [vmem:[%s0 + $0x180] sm:$0xff]
    %v1732 = vld [vmem:[%s0 + $0x188] sm:$0xff]
    %v1733 = vld [vmem:[%s0 + $0x190] sm:$0xff]
    %v1734 = vld [vmem:[%s0 + $0x198] sm:$0xff]
    %v1735 = vld [vmem:[%s0 + $0x1a0] sm:$0xff]
    %v1736 = vld [vmem:[%s0 + $0x1a8] sm:$0xff]
    %v1737 = vld [vmem:[%s0 + $0x1b0] sm:$0xff]
    %v1738 = vld [vmem:[%s0 + $0x1b8] sm:$0xff]
    %v1739 = vld [vmem:[%s0 + $0x1c0] sm:$0xff]
    %v1740 = vld [vmem:[%s0 + $0x1c8] sm:$0xff]
    %v1741 = vld [vmem:[%s0 + $0x1d0] sm:$0xff]
    %v1742 = vld [vmem:[%s0 + $0x1d8] sm:$0xff]
    %v1743 = vld [vmem:[%s0 + $0x1e0] sm:$0xff]
    %v1744 = vld [vmem:[%s0 + $0x1e8] sm:$0xff]
    %v1745 = vld [vmem:[%s0 + $0x1f0] sm:$0xff]
    %v1746 = vld [vmem:[%s0 + $0x1f8] sm:$0xff]
    %v1747 = vld [vmem:[%s0 + $0x200] sm:$0xff]
    %v1748 = vld [vmem:[%s0 + $0x208] sm:$0xff]
    %v1749 = vld [vmem:[%s0 + $0x210] sm:$0xff]
    %v1750 = vld [vmem:[%s0 + $0x218] sm:$0xff]
    %v1751 = vld [vmem:[%s0 + $0x220] sm:$0xff]
    %v1752 = vld [vmem:[%s0 + $0x228] sm:$0xff]
    %v1753 = vld [vmem:[%s0 + $0x230] sm:$0xff]
    %v1754 = vld [vmem:[%s0 + $0x238] sm:$0xff]
    %v1755 = vld [vmem:[%s0 + $0x240] sm:$0xff]
    %v1756 = vld [vmem:[%s0 + $0x248] sm:$0xff]
    %v1757 = vld [vmem:[%s0 + $0x250] sm:$0xff]
    %v1758 = vld [vmem:[%s0 + $0x258] sm:$0xff]
    %v1759 = vld [vmem:[%s0 + $0x260] sm:$0xff]
    %v1760 = vld [vmem:[%s0 + $0x268] sm:$0xff]
    %v1761 = vld [vmem:[%s0 + $0x270] sm:$0xff]
    %v1762 = vld [vmem:[%s0 + $0x278] sm:$0xff]
    %v1763 = vld [vmem:[%s0 + $0x280] sm:$0xff]
    %v1764 = vld [vmem:[%s0 + $0x288] sm:$0xff]
    %v1765 = vld [vmem:[%s0 + $0x290] sm:$0xff]
    %v1766 = vld [vmem:[%s0 + $0x298] sm:$0xff]
    %v1767 = vld [vmem:[%s0 + $0x2a0] sm:$0xff]
    %v1768 = vld [vmem:[%s0 + $0x2a8] sm:$0xff]
    %v1769 = vld [vmem:[%s0 + $0x2b0] sm:$0xff]
    %v1770 = vld [vmem:[%s0 + $0x2b8] sm:$0xff]
    %v1771 = vld [vmem:[%s0 + $0x2c0] sm:$0xff]
    %v1772 = vld [vmem:[%s0 + $0x2c8] sm:$0xff]
    %v1773 = vld [vmem:[%s0 + $0x2d0] sm:$0xff]
    %v1774 = vld [vmem:[%s0 + $0x2d8] sm:$0xff]
    %v1775 = vld [vmem:[%s0 + $0x2e0] sm:$0xff]
    %v1776 = vld [vmem:[%s0 + $0x2e8] sm:$0xff]
    %v1777 = vld [vmem:[%s0 + $0x2f0] sm:$0xff]
    %v1778 = vld [vmem:[%s0 + $0x2f8] sm:$0xff]
    %v1779 = vld [vmem:[%s0 + $0x300] sm:$0xff]
    %v1780 = vld [vmem:[%s0 + $0x308] sm:$0xff]
    %v1781 = vld [vmem:[%s0 + $0x310] sm:$0xff]
    %v1782 = vld [vmem:[%s0 + $0x318] sm:$0xff]
    %v1783 = vld [vmem:[%s0 + $0x320] sm:$0xff]
    %v1784 = vld [vmem:[%s0 + $0x328] sm:$0xff]
    %v1785 = vld [vmem:[%s0 + $0x330] sm:$0xff]
    %v1786 = vld [vmem:[%s0 + $0x338] sm:$0xff]
    %v1787 = vld [vmem:[%s0 + $0x340] sm:$0xff]
    %v1788 = vld [vmem:[%s0 + $0x348] sm:$0xff]
    %v1789 = vld [vmem:[%s0 + $0x350] sm:$0xff]
    %v1790 = vld [vmem:[%s0 + $0x358] sm:$0xff]
    %v1791 = vld [vmem:[%s0 + $0x360] sm:$0xff]
    %v1792 = vld [vmem:[%s0 + $0x368] sm:$0xff]
    %v1793 = vld [vmem:[%s0 + $0x370] sm:$0xff]
    %v1794 = vld [vmem:[%s0 + $0x378] sm:$0xff]
    %v1795 = vld [vmem:[%s0 + $0x380] sm:$0xff]
    %v1796 = vld [vmem:[%s0 + $0x388] sm:$0xff]
    %v1797 = vld [vmem:[%s0 + $0x390] sm:$0xff]
    %v1798 = vld [vmem:[%s0 + $0x398] sm:$0xff]
    %v1799 = vld [vmem:[%s0 + $0x3a0] sm:$0xff]
    %v1800 = vld [vmem:[%s0 + $0x3a8] sm:$0xff]
    %v1801 = vld [vmem:[%s0 + $0x3b0] sm:$0xff]
    %v1802 = vld [vmem:[%s0 + $0x3b8] sm:$0xff]
    %v1803 = vld [vmem:[%s0 + $0x3c0] sm:$0xff]
    %v1804 = vld [vmem:[%s0 + $0x3c8] sm:$0xff]
    %v1805 = vld [vmem:[%s0 + $0x3d0] sm:$0xff]
    %v1806 = vld [vmem:[%s0 + $0x3d8] sm:$0xff]
    %v1807 = vld [vmem:[%s0 + $0x3e0] sm:$0xff]
    %v1808 = vld [vmem:[%s0 + $0x3e8] sm:$0xff]
    %v1809 = vld [vmem:[%s0 + $0x3f0] sm:$0xff]
    %v1810 = vld [vmem:[%s0 + $0x3f8] sm:$0xff]
    %v1811 = vld [vmem:[%s5] sm:$0xff]
    %v1812 = vld [vmem:[%s5 + $0x8] sm:$0xff]
    %v1813 = vld [vmem:[#allocation2] sm:$0xff]
    %v1814 = vld [vmem:[#allocation2 + $0x8] sm:$0xff]
    %v1815 = vld [vmem:[#allocation2 + $0x10] sm:$0xff]
    %v1816 = vld [vmem:[#allocation2 + $0x18] sm:$0xff]
    %v1821 = vcombine.high %v1813, %v1813
    %v1822 = vcombine.high %v1814, %v1814
    %v1823 = vcombine.high %v1815, %v1815
    %v1824 = vcombine.high %v1816, %v1816
    %vm1825 = vcmask 31744
    %v1827 = vsel %vm1825, %v1811, 0
    %v1830 = vsel %vm1825, %v1812, 0
    %vm1832 = vcmask 1043456
    %v1833 = vsel %vm1832, %v1813, 0
    %v1835 = vsel %vm1832, %v1821, 0
    %v1837 = vsel %vm1832, %v1814, 0
    %v1839 = vsel %vm1832, %v1822, 0
    %v1841 = vsel %vm1832, %v1815, 0
    %v1843 = vsel %vm1832, %v1823, 0
    %v1845 = vsel %vm1832, %v1816, 0
    %v1847 = vsel %vm1832, %v1824, 0
    %1849 = vmatprep.subr.mxu0 %v1835
    %1850 = vmatpush1.msra.mxu0 %v1833
    %1851 = vmatprep.subr.mxu0 0.0
    %1852 = vmatpush1.msra.mxu0 0.0
    %1853 = vmatprep.subr.mxu0 0.0
    %1854 = vmatpush1.msra.mxu0 0.0
    %1855 = vmatprep.subr.mxu0 0.0
    %1856 = vmatpush1.msra.mxu0 0.0
    %1857 = vmatprep.subr.mxu0 0.0
    %1858 = vmatpush1.msra.mxu0 0.0
    %1859 = vmatprep.subr.mxu0 0.0
    %1860 = vmatpush1.msra.mxu0 0.0
    %1861 = vmatprep.subr.mxu0 0.0
    %1862 = vmatpush1.msra.mxu0 0.0
    %1863 = vmatprep.subr.mxu0 0.0
    %1864 = vmatpush1.msra.mxu0 0.0
    %1865 = vmatprep.subr.mxu0 0.0
    %1866 = vmatpush1.msra.mxu0 0.0
    %1867 = vmatprep.subr.mxu0 0.0
    %1868 = vmatpush1.msra.mxu0 0.0
    %1869 = vmatprep.subr.mxu0 0.0
    %1870 = vmatpush1.msra.mxu0 0.0
    %1871 = vmatprep.subr.mxu0 0.0
    %1872 = vmatpush1.msra.mxu0 0.0
    %1873 = vmatprep.subr.mxu0 0.0
    %1874 = vmatpush1.msra.mxu0 0.0
    %1875 = vmatprep.subr.mxu0 0.0
    %1876 = vmatpush1.msra.mxu0 0.0
    %1877 = vmatprep.subr.mxu0 0.0
    %1878 = vmatpush1.msra.mxu0 0.0
    %1879 = vmatprep.subr.mxu0 0.0
    %1880 = vmatpush1.msra.mxu0 0.0
    %1881 = vmatprep.subr.mxu0 0.0
    %1882 = vmatpush1.msra.mxu0 0.0
    %1883 = vmatprep.subr.mxu0 0.0
    %1884 = vmatpush1.msra.mxu0 0.0
    %1885 = vmatprep.subr.mxu0 0.0
    %1886 = vmatpush1.msra.mxu0 0.0
    %1887 = vmatprep.subr.mxu0 0.0
    %1888 = vmatpush1.msra.mxu0 0.0
    %1889 = vmatprep.subr.mxu0 0.0
    %1890 = vmatpush1.msra.mxu0 0.0
    %1891 = vmatprep.subr.mxu0 0.0
    %1892 = vmatpush1.msra.mxu0 0.0
    %1893 = vmatprep.subr.mxu0 0.0
    %1894 = vmatpush1.msra.mxu0 0.0
    %1895 = vmatprep.subr.mxu0 0.0
    %1896 = vmatpush1.msra.mxu0 0.0
    %1897 = vmatprep.subr.mxu0 0.0
    %1898 = vmatpush1.msra.mxu0 0.0
    %1899 = vmatprep.subr.mxu0 0.0
    %1900 = vmatpush1.msra.mxu0 0.0
    %1901 = vmatprep.subr.mxu0 0.0
    %1902 = vmatpush1.msra.mxu0 0.0
    %1903 = vmatprep.subr.mxu0 0.0
    %1904 = vmatpush1.msra.mxu0 0.0
    %1905 = vmatprep.subr.mxu0 0.0
    %1906 = vmatpush1.msra.mxu0 0.0
    %1907 = vmatprep.subr.mxu0 0.0
    %1908 = vmatpush1.msra.mxu0 0.0
    %1909 = vmatprep.subr.mxu0 0.0
    %1910 = vmatpush1.msra.mxu0 0.0
    %1911 = vmatprep.subr.mxu0 0.0
    %1912 = vmatpush1.msra.mxu0 0.0
    %1913 = vmatprep.mubr.f32.mxu0 0.0
    %1914 = vmatmul.mubr.f32.gmra.mrb[0].mxu0 %v1827
    %v1915 = vpop.f32.mrb[0].mxu0
    %v1916 = vadd.f32 0.0, %v1915
    %v1917 = vpop.f32.mrb[0].mxu0
    %v1918 = vadd.f32 0.0, %v1917
    %1919 = vmatprep.mubr.f32.mxu0 0.0
    %1920 = vmatmul.mubr.f32.gmra.mrb[0].mxu0 %v1830
    %v1921 = vpop.f32.mrb[0].mxu0
    %v1922 = vadd.f32 0.0, %v1921
    %v1923 = vpop.f32.mrb[0].mxu0
    %v1924 = vadd.f32 0.0, %v1923
    %1925 = vdwg.mxu0
    %1926 = vmatprep.subr.mxu0 %v1839
    %1927 = vmatpush1.msra.mxu0 %v1837
    %1928 = vmatprep.subr.mxu0 0.0
    %1929 = vmatpush1.msra.mxu0 0.0
    %1930 = vmatprep.subr.mxu0 0.0
    %1931 = vmatpush1.msra.mxu0 0.0
    %1932 = vmatprep.subr.mxu0 0.0
    %1933 = vmatpush1.msra.mxu0 0.0
    %1934 = vmatprep.subr.mxu0 0.0
    %1935 = vmatpush1.msra.mxu0 0.0
    %1936 = vmatprep.subr.mxu0 0.0
    %1937 = vmatpush1.msra.mxu0 0.0
    %1938 = vmatprep.subr.mxu0 0.0
    %1939 = vmatpush1.msra.mxu0 0.0
    %1940 = vmatprep.subr.mxu0 0.0
    %1941 = vmatpush1.msra.mxu0 0.0
    %1942 = vmatprep.subr.mxu0 0.0
    %1943 = vmatpush1.msra.mxu0 0.0
    %1944 = vmatprep.subr.mxu0 0.0
    %1945 = vmatpush1.msra.mxu0 0.0
    %1946 = vmatprep.subr.mxu0 0.0
    %1947 = vmatpush1.msra.mxu0 0.0
    %1948 = vmatprep.subr.mxu0 0.0
    %1949 = vmatpush1.msra.mxu0 0.0
    %1950 = vmatprep.subr.mxu0 0.0
    %1951 = vmatpush1.msra.mxu0 0.0
    %1952 = vmatprep.subr.mxu0 0.0
    %1953 = vmatpush1.msra.mxu0 0.0
    %1954 = vmatprep.subr.mxu0 0.0
    %1955 = vmatpush1.msra.mxu0 0.0
    %1956 = vmatprep.subr.mxu0 0.0
    %1957 = vmatpush1.msra.mxu0 0.0
    %1958 = vmatprep.subr.mxu0 0.0
    %1959 = vmatpush1.msra.mxu0 0.0
    %1960 = vmatprep.subr.mxu0 0.0
    %1961 = vmatpush1.msra.mxu0 0.0
    %1962 = vmatprep.subr.mxu0 0.0
    %1963 = vmatpush1.msra.mxu0 0.0
    %1964 = vmatprep.subr.mxu0 0.0
    %1965 = vmatpush1.msra.mxu0 0.0
    %1966 = vmatprep.subr.mxu0 0.0
    %1967 = vmatpush1.msra.mxu0 0.0
    %1968 = vmatprep.subr.mxu0 0.0
    %1969 = vmatpush1.msra.mxu0 0.0
    %1970 = vmatprep.subr.mxu0 0.0
    %1971 = vmatpush1.msra.mxu0 0.0
    %1972 = vmatprep.subr.mxu0 0.0
    %1973 = vmatpush1.msra.mxu0 0.0
    %1974 = vmatprep.subr.mxu0 0.0
    %1975 = vmatpush1.msra.mxu0 0.0
    %1976 = vmatprep.subr.mxu0 0.0
    %1977 = vmatpush1.msra.mxu0 0.0
    %1978 = vmatprep.subr.mxu0 0.0
    %1979 = vmatpush1.msra.mxu0 0.0
    %1980 = vmatprep.subr.mxu0 0.0
    %1981 = vmatpush1.msra.mxu0 0.0
    %1982 = vmatprep.subr.mxu0 0.0
    %1983 = vmatpush1.msra.mxu0 0.0
    %1984 = vmatprep.subr.mxu0 0.0
    %1985 = vmatpush1.msra.mxu0 0.0
    %1986 = vmatprep.subr.mxu0 0.0
    %1987 = vmatpush1.msra.mxu0 0.0
    %1988 = vmatprep.subr.mxu0 0.0
    %1989 = vmatpush1.msra.mxu0 0.0
    %1990 = vmatprep.mubr.f32.mxu0 0.0
    %1991 = vmatmul.mubr.f32.gmra.mrb[0].mxu0 %v1827
    %v1992 = vpop.f32.mrb[0].mxu0
    %v1993 = vadd.f32 0.0, %v1992
    %v1994 = vpop.f32.mrb[0].mxu0
    %v1995 = vadd.f32 0.0, %v1994
    %1996 = vmatprep.mubr.f32.mxu0 0.0
    %1997 = vmatmul.mubr.f32.gmra.mrb[0].mxu0 %v1830
    %v1998 = vpop.f32.mrb[0].mxu0
    %v1999 = vadd.f32 0.0, %v1998
    %v2000 = vpop.f32.mrb[0].mxu0
    %v2001 = vadd.f32 0.0, %v2000
    %2002 = vdwg.mxu0
    %2003 = vmatprep.subr.mxu0 %v1843
    %2004 = vmatpush1.msra.mxu0 %v1841
    %2005 = vmatprep.subr.mxu0 0.0
    %2006 = vmatpush1.msra.mxu0 0.0
    %2007 = vmatprep.subr.mxu0 0.0
    %2008 = vmatpush1.msra.mxu0 0.0
    %2009 = vmatprep.subr.mxu0 0.0
    %2010 = vmatpush1.msra.mxu0 0.0
    %2011 = vmatprep.subr.mxu0 0.0
    %2012 = vmatpush1.msra.mxu0 0.0
    %2013 = vmatprep.subr.mxu0 0.0
    %2014 = vmatpush1.msra.mxu0 0.0
    %2015 = vmatprep.subr.mxu0 0.0
    %2016 = vmatpush1.msra.mxu0 0.0
    %2017 = vmatprep.subr.mxu0 0.0
    %2018 = vmatpush1.msra.mxu0 0.0
    %2019 = vmatprep.subr.mxu0 0.0
    %2020 = vmatpush1.msra.mxu0 0.0
    %2021 = vmatprep.subr.mxu0 0.0
    %2022 = vmatpush1.msra.mxu0 0.0
    %2023 = vmatprep.subr.mxu0 0.0
    %2024 = vmatpush1.msra.mxu0 0.0
    %2025 = vmatprep.subr.mxu0 0.0
    %2026 = vmatpush1.msra.mxu0 0.0
    %2027 = vmatprep.subr.mxu0 0.0
    %2028 = vmatpush1.msra.mxu0 0.0
    %2029 = vmatprep.subr.mxu0 0.0
    %2030 = vmatpush1.msra.mxu0 0.0
    %2031 = vmatprep.subr.mxu0 0.0
    %2032 = vmatpush1.msra.mxu0 0.0
    %2033 = vmatprep.subr.mxu0 0.0
    %2034 = vmatpush1.msra.mxu0 0.0
    %2035 = vmatprep.subr.mxu0 0.0
    %2036 = vmatpush1.msra.mxu0 0.0
    %2037 = vmatprep.subr.mxu0 0.0
    %2038 = vmatpush1.msra.mxu0 0.0
    %2039 = vmatprep.subr.mxu0 0.0
    %2040 = vmatpush1.msra.mxu0 0.0
    %2041 = vmatprep.subr.mxu0 0.0
    %2042 = vmatpush1.msra.mxu0 0.0
    %2043 = vmatprep.subr.mxu0 0.0
    %2044 = vmatpush1.msra.mxu0 0.0
    %2045 = vmatprep.subr.mxu0 0.0
    %2046 = vmatpush1.msra.mxu0 0.0
    %2047 = vmatprep.subr.mxu0 0.0
    %2048 = vmatpush1.msra.mxu0 0.0
    %2049 = vmatprep.subr.mxu0 0.0
    %2050 = vmatpush1.msra.mxu0 0.0
    %2051 = vmatprep.subr.mxu0 0.0
    %2052 = vmatpush1.msra.mxu0 0.0
    %2053 = vmatprep.subr.mxu0 0.0
    %2054 = vmatpush1.msra.mxu0 0.0
    %2055 = vmatprep.subr.mxu0 0.0
    %2056 = vmatpush1.msra.mxu0 0.0
    %2057 = vmatprep.subr.mxu0 0.0
    %2058 = vmatpush1.msra.mxu0 0.0
    %2059 = vmatprep.subr.mxu0 0.0
    %2060 = vmatpush1.msra.mxu0 0.0
    %2061 = vmatprep.subr.mxu0 0.0
    %2062 = vmatpush1.msra.mxu0 0.0
    %2063 = vmatprep.subr.mxu0 0.0
    %2064 = vmatpush1.msra.mxu0 0.0
    %2065 = vmatprep.subr.mxu0 0.0
    %2066 = vmatpush1.msra.mxu0 0.0
    %2067 = vmatprep.mubr.f32.mxu0 0.0
    %2068 = vmatmul.mubr.f32.gmra.mrb[0].mxu0 %v1827
    %v2069 = vpop.f32.mrb[0].mxu0
    %v2070 = vadd.f32 0.0, %v2069
    %v2071 = vpop.f32.mrb[0].mxu0
    %v2072 = vadd.f32 0.0, %v2071
    %2073 = vmatprep.mubr.f32.mxu0 0.0
    %2074 = vmatmul.mubr.f32.gmra.mrb[0].mxu0 %v1830
    %v2075 = vpop.f32.mrb[0].mxu0
    %v2076 = vadd.f32 0.0, %v2075
    %v2077 = vpop.f32.mrb[0].mxu0
    %v2078 = vadd.f32 0.0, %v2077
    %2079 = vdwg.mxu0
    %2080 = vmatprep.subr.mxu0 %v1847
    %2081 = vmatpush1.msra.mxu0 %v1845
    %2082 = vmatprep.subr.mxu0 0.0
    %2083 = vmatpush1.msra.mxu0 0.0
    %2084 = vmatprep.subr.mxu0 0.0
    %2085 = vmatpush1.msra.mxu0 0.0
    %2086 = vmatprep.subr.mxu0 0.0
    %2087 = vmatpush1.msra.mxu0 0.0
    %2088 = vmatprep.subr.mxu0 0.0
    %2089 = vmatpush1.msra.mxu0 0.0
    %2090 = vmatprep.subr.mxu0 0.0
    %2091 = vmatpush1.msra.mxu0 0.0
    %2092 = vmatprep.subr.mxu0 0.0
    %2093 = vmatpush1.msra.mxu0 0.0
    %2094 = vmatprep.subr.mxu0 0.0
    %2095 = vmatpush1.msra.mxu0 0.0
    %2096 = vmatprep.subr.mxu0 0.0
    %2097 = vmatpush1.msra.mxu0 0.0
    %2098 = vmatprep.subr.mxu0 0.0
    %2099 = vmatpush1.msra.mxu0 0.0
    %2100 = vmatprep.subr.mxu0 0.0
    %2101 = vmatpush1.msra.mxu0 0.0
    %2102 = vmatprep.subr.mxu0 0.0
    %2103 = vmatpush1.msra.mxu0 0.0
    %2104 = vmatprep.subr.mxu0 0.0
    %2105 = vmatpush1.msra.mxu0 0.0
    %2106 = vmatprep.subr.mxu0 0.0
    %2107 = vmatpush1.msra.mxu0 0.0
    %2108 = vmatprep.subr.mxu0 0.0
    %2109 = vmatpush1.msra.mxu0 0.0
    %2110 = vmatprep.subr.mxu0 0.0
    %2111 = vmatpush1.msra.mxu0 0.0
    %2112 = vmatprep.subr.mxu0 0.0
    %2113 = vmatpush1.msra.mxu0 0.0
    %2114 = vmatprep.subr.mxu0 0.0
    %2115 = vmatpush1.msra.mxu0 0.0
    %2116 = vmatprep.subr.mxu0 0.0
    %2117 = vmatpush1.msra.mxu0 0.0
    %2118 = vmatprep.subr.mxu0 0.0
    %2119 = vmatpush1.msra.mxu0 0.0
    %2120 = vmatprep.subr.mxu0 0.0
    %2121 = vmatpush1.msra.mxu0 0.0
    %2122 = vmatprep.subr.mxu0 0.0
    %2123 = vmatpush1.msra.mxu0 0.0
    %2124 = vmatprep.subr.mxu0 0.0
    %2125 = vmatpush1.msra.mxu0 0.0
    %2126 = vmatprep.subr.mxu0 0.0
    %2127 = vmatpush1.msra.mxu0 0.0
    %2128 = vmatprep.subr.mxu0 0.0
    %2129 = vmatpush1.msra.mxu0 0.0
    %2130 = vmatprep.subr.mxu0 0.0
    %2131 = vmatpush1.msra.mxu0 0.0
    %2132 = vmatprep.subr.mxu0 0.0
    %2133 = vmatpush1.msra.mxu0 0.0
    %2134 = vmatprep.subr.mxu0 0.0
    %2135 = vmatpush1.msra.mxu0 0.0
    %2136 = vmatprep.subr.mxu0 0.0
    %2137 = vmatpush1.msra.mxu0 0.0
    %2138 = vmatprep.subr.mxu0 0.0
    %2139 = vmatpush1.msra.mxu0 0.0
    %2140 = vmatprep.subr.mxu0 0.0
    %2141 = vmatpush1.msra.mxu0 0.0
    %2142 = vmatprep.subr.mxu0 0.0
    %2143 = vmatpush1.msra.mxu0 0.0
    %2144 = vmatprep.mubr.f32.mxu0 0.0
    %2145 = vmatmul.mubr.f32.gmra.mrb[0].mxu0 %v1827
    %v2146 = vpop.f32.mrb[0].mxu0
    %v2147 = vadd.f32 0.0, %v2146
    %v2148 = vpop.f32.mrb[0].mxu0
    %v2149 = vadd.f32 0.0, %v2148
    %2150 = vmatprep.mubr.f32.mxu0 0.0
    %2151 = vmatmul.mubr.f32.gmra.mrb[0].mxu0 %v1830
    %v2152 = vpop.f32.mrb[0].mxu0
    %v2153 = vadd.f32 0.0, %v2152
    %v2154 = vpop.f32.mrb[0].mxu0
    %v2155 = vadd.f32 0.0, %v2154
    %2156 = vdwg.mxu0
    %vm2157 = vcmask 97280
    %v2159 = vsel %vm2157, %v1681, 0
    %v2162 = vsel %vm2157, %v1682, 0
    %v2165 = vsel %vm2157, %v1683, 0
    %v2168 = vsel %vm2157, %v1684, 0
    %v2171 = vsel %vm2157, %v1685, 0
    %v2174 = vsel %vm2157, %v1686, 0
    %v2177 = vsel %vm2157, %v1687, 0
    %v2180 = vsel %vm2157, %v1688, 0
    %v2183 = vsel %vm2157, %v1689, 0
    %v2186 = vsel %vm2157, %v1690, 0
    %v2189 = vsel %vm2157, %v1691, 0
    %v2192 = vsel %vm2157, %v1692, 0
    %v2195 = vsel %vm2157, %v1693, 0
    %v2198 = vsel %vm2157, %v1694, 0
    %v2201 = vsel %vm2157, %v1695, 0
    %v2204 = vsel %vm2157, %v1696, 0
    %v2207 = vsel %vm2157, %v1697, 0
    %v2210 = vsel %vm2157, %v1698, 0
    %v2213 = vsel %vm2157, %v1699, 0
    %v2216 = vsel %vm2157, %v1700, 0
    %v2219 = vsel %vm2157, %v1701, 0
    %v2222 = vsel %vm2157, %v1702, 0
    %v2225 = vsel %vm2157, %v1703, 0
    %v2228 = vsel %vm2157, %v1704, 0
    %v2231 = vsel %vm2157, %v1705, 0
    %v2234 = vsel %vm2157, %v1706, 0
    %v2237 = vsel %vm2157, %v1707, 0
    %v2240 = vsel %vm2157, %v1708, 0
    %v2243 = vsel %vm2157, %v1709, 0
    %v2246 = vsel %vm2157, %v1710, 0
    %v2249 = vsel %vm2157, %v1711, 0
    %v2252 = vsel %vm2157, %v1712, 0
    %v2255 = vsel %vm2157, %v1713, 0
    %v2258 = vsel %vm2157, %v1714, 0
    %v2261 = vsel %vm2157, %v1715, 0
    %v2264 = vsel %vm2157, %v1716, 0
    %v2267 = vsel %vm2157, %v1717, 0
    %v2270 = vsel %vm2157, %v1718, 0
    %v2273 = vsel %vm2157, %v1719, 0
    %v2276 = vsel %vm2157, %v1720, 0
    %v2279 = vsel %vm2157, %v1721, 0
    %v2282 = vsel %vm2157, %v1722, 0
    %v2285 = vsel %vm2157, %v1723, 0
    %v2288 = vsel %vm2157, %v1724, 0
    %v2291 = vsel %vm2157, %v1725, 0
    %v2294 = vsel %vm2157, %v1726, 0
    %v2297 = vsel %vm2157, %v1727, 0
    %v2300 = vsel %vm2157, %v1728, 0
    %v2303 = vsel %vm2157, %v1729, 0
    %v2306 = vsel %vm2157, %v1730, 0
    %v2309 = vsel %vm2157, %v1731, 0
    %v2312 = vsel %vm2157, %v1732, 0
    %v2315 = vsel %vm2157, %v1733, 0
    %v2318 = vsel %vm2157, %v1734, 0
    %v2321 = vsel %vm2157, %v1735, 0
    %v2324 = vsel %vm2157, %v1736, 0
    %v2327 = vsel %vm2157, %v1737, 0
    %v2330 = vsel %vm2157, %v1738, 0
    %v2333 = vsel %vm2157, %v1739, 0
    %v2336 = vsel %vm2157, %v1740, 0
    %v2339 = vsel %vm2157, %v1741, 0
    %v2342 = vsel %vm2157, %v1742, 0
    %v2345 = vsel %vm2157, %v1743, 0
    %v2348 = vsel %vm2157, %v1744, 0
    %v2351 = vsel %vm2157, %v1745, 0
    %v2354 = vsel %vm2157, %v1746, 0
    %v2357 = vsel %vm2157, %v1747, 0
    %v2360 = vsel %vm2157, %v1748, 0
    %v2363 = vsel %vm2157, %v1749, 0
    %v2366 = vsel %vm2157, %v1750, 0
    %v2369 = vsel %vm2157, %v1751, 0
    %v2372 = vsel %vm2157, %v1752, 0
    %v2375 = vsel %vm2157, %v1753, 0
    %v2378 = vsel %vm2157, %v1754, 0
    %v2381 = vsel %vm2157, %v1755, 0
    %v2384 = vsel %vm2157, %v1756, 0
    %v2387 = vsel %vm2157, %v1757, 0
    %v2390 = vsel %vm2157, %v1758, 0
    %v2393 = vsel %vm2157, %v1759, 0
    %v2396 = vsel %vm2157, %v1760, 0
    %v2399 = vsel %vm2157, %v1761, 0
    %v2402 = vsel %vm2157, %v1762, 0
    %v2405 = vsel %vm2157, %v1763, 0
    %v2408 = vsel %vm2157, %v1764, 0
    %v2411 = vsel %vm2157, %v1765, 0
    %v2414 = vsel %vm2157, %v1766, 0
    %v2417 = vsel %vm2157, %v1767, 0
    %v2420 = vsel %vm2157, %v1768, 0
    %v2423 = vsel %vm2157, %v1769, 0
    %v2426 = vsel %vm2157, %v1770, 0
    %v2429 = vsel %vm2157, %v1771, 0
    %v2432 = vsel %vm2157, %v1772, 0
    %v2435 = vsel %vm2157, %v1773, 0
    %v2438 = vsel %vm2157, %v1774, 0
    %v2441 = vsel %vm2157, %v1775, 0
    %v2444 = vsel %vm2157, %v1776, 0
    %v2447 = vsel %vm2157, %v1777, 0
    %v2450 = vsel %vm2157, %v1778, 0
    %v2453 = vsel %vm2157, %v1779, 0
    %v2456 = vsel %vm2157, %v1780, 0
    %v2459 = vsel %vm2157, %v1781, 0
    %v2462 = vsel %vm2157, %v1782, 0
    %v2465 = vsel %vm2157, %v1783, 0
    %v2468 = vsel %vm2157, %v1784, 0
    %v2471 = vsel %vm2157, %v1785, 0
    %v2474 = vsel %vm2157, %v1786, 0
    %v2477 = vsel %vm2157, %v1787, 0
    %v2480 = vsel %vm2157, %v1788, 0
    %v2483 = vsel %vm2157, %v1789, 0
    %v2486 = vsel %vm2157, %v1790, 0
    %v2489 = vsel %vm2157, %v1791, 0
    %v2492 = vsel %vm2157, %v1792, 0
    %v2495 = vsel %vm2157, %v1793, 0
    %v2498 = vsel %vm2157, %v1794, 0
    %v2501 = vsel %vm2157, %v1795, 0
    %v2504 = vsel %vm2157, %v1796, 0
    %v2507 = vsel %vm2157, %v1797, 0
    %v2510 = vsel %vm2157, %v1798, 0
    %v2513 = vsel %vm2157, %v1799, 0
    %v2516 = vsel %vm2157, %v1800, 0
    %v2519 = vsel %vm2157, %v1801, 0
    %v2522 = vsel %vm2157, %v1802, 0
    %v2525 = vsel %vm2157, %v1803, 0
    %v2528 = vsel %vm2157, %v1804, 0
    %v2531 = vsel %vm2157, %v1805, 0
    %v2534 = vsel %vm2157, %v1806, 0
    %v2537 = vsel %vm2157, %v1807, 0
    %v2540 = vsel %vm2157, %v1808, 0
    %v2543 = vsel %vm2157, %v1809, 0
    %v2546 = vsel %vm2157, %v1810, 0
    %2548 = vmatprep.subr.mxu0 0.0
    %2549 = vmatpush1.xpose.msra.mxu0 %v2165
    %2550 = vmatprep.subr.mxu0 0.0
    %2551 = vmatpush1.xpose.msra.mxu0 %v2168
    %2552 = vmatprep.subr.mxu0 0.0
    %2553 = vmatpush1.xpose.msra.mxu0 %v2171
    %2554 = vmatprep.subr.mxu0 0.0
    %2555 = vmatpush1.xpose.msra.mxu0 %v2174
    %2556 = vmatprep.subr.mxu0 0.0
    %2557 = vmatpush1.xpose.msra.mxu0 %v2177
    %2558 = vmatprep.subr.mxu0 0.0
    %2559 = vmatpush1.xpose.msra.mxu0 %v2180
    %2560 = vmatprep.subr.mxu0 0.0
    %2561 = vmatpush1.xpose.msra.mxu0 %v2183
    %2562 = vmatprep.subr.mxu0 0.0
    %2563 = vmatpush1.xpose.msra.mxu0 %v2186
    %2564 = vmatprep.subr.mxu0 0.0
    %2565 = vmatpush1.xpose.msra.mxu0 %v2189
    %2566 = vmatprep.subr.mxu0 0.0
    %2567 = vmatpush1.xpose.msra.mxu0 %v2192
    %2568 = vmatprep.subr.mxu0 0.0
    %2569 = vmatpush1.xpose.msra.mxu0 %v2195
    %2570 = vmatprep.subr.mxu0 0.0
    %2571 = vmatpush1.xpose.msra.mxu0 %v2198
    %2572 = vmatprep.subr.mxu0 0.0
    %2573 = vmatpush1.xpose.msra.mxu0 %v2201
    %2574 = vmatprep.subr.mxu0 0.0
    %2575 = vmatpush1.xpose.msra.mxu0 %v2204
    %2576 = vmatprep.subr.mxu0 0.0
    %2577 = vmatpush1.xpose.msra.mxu0 %v2207
    %2578 = vmatprep.subr.mxu0 0.0
    %2579 = vmatpush1.xpose.msra.mxu0 %v2210
    %2580 = vmatprep.subr.mxu0 0.0
    %2581 = vmatpush1.xpose.msra.mxu0 %v2213
    %2582 = vmatprep.subr.mxu0 0.0
    %2583 = vmatpush1.xpose.msra.mxu0 %v2216
    %2584 = vmatprep.subr.mxu0 0.0
    %2585 = vmatpush1.xpose.msra.mxu0 %v2219
    %2586 = vmatprep.subr.mxu0 0.0
    %2587 = vmatpush1.xpose.msra.mxu0 %v2222
    %2588 = vmatprep.subr.mxu0 0.0
    %2589 = vmatpush1.xpose.msra.mxu0 %v2225
    %2590 = vmatprep.subr.mxu0 0.0
    %2591 = vmatpush1.xpose.msra.mxu0 %v2228
    %2592 = vmatprep.subr.mxu0 0.0
    %2593 = vmatpush1.xpose.msra.mxu0 %v2231
    %2594 = vmatprep.subr.mxu0 0.0
    %2595 = vmatpush1.xpose.msra.mxu0 %v2234
    %2596 = vmatprep.subr.mxu0 0.0
    %2597 = vmatpush1.xpose.msra.mxu0 %v2237
    %2598 = vmatprep.subr.mxu0 0.0
    %2599 = vmatpush1.xpose.msra.mxu0 %v2240
    %2600 = vmatprep.subr.mxu0 0.0
    %2601 = vmatpush1.xpose.msra.mxu0 %v2243
    %2602 = vmatprep.subr.mxu0 0.0
    %2603 = vmatpush1.xpose.msra.mxu0 %v2246
    %2604 = vmatprep.subr.mxu0 0.0
    %2605 = vmatpush1.xpose.msra.mxu0 %v2249
    %2606 = vmatprep.subr.mxu0 0.0
    %2607 = vmatpush1.xpose.msra.mxu0 %v2252
    %2608 = vmatprep.subr.mxu0 0.0
    %2609 = vmatpush1.xpose.msra.mxu0 %v2255
    %2610 = vmatprep.subr.mxu0 0.0
    %2611 = vmatpush1.xpose.msra.mxu0 %v2258
    %2612 = vmatprep.mubr.f32.mxu0 0.0
    %2613 = vmatmul.mubr.f32.gmra.mrb[0].mxu0 %v2159
    %v2614 = vpop.f32.mrb[0].mxu0
    %v2615 = vadd.f32 %v1916, %v2614
    %v2616 = vpop.f32.mrb[0].mxu0
    %v2617 = vadd.f32 %v1918, %v2616
    %2618 = vmatprep.mubr.f32.mxu0 0.0
    %2619 = vmatmul.mubr.f32.gmra.mrb[0].mxu0 %v2162
    %v2620 = vpop.f32.mrb[0].mxu0
    %v2621 = vadd.f32 %v1922, %v2620
    %v2622 = vpop.f32.mrb[0].mxu0
    %v2623 = vadd.f32 %v1924, %v2622
    %2624 = vdwg.mxu0
    %2625 = vmatprep.subr.mxu0 0.0
    %2626 = vmatpush1.xpose.msra.mxu0 %v2261
    %2627 = vmatprep.subr.mxu0 0.0
    %2628 = vmatpush1.xpose.msra.mxu0 %v2264
    %2629 = vmatprep.subr.mxu0 0.0
    %2630 = vmatpush1.xpose.msra.mxu0 %v2267
    %2631 = vmatprep.subr.mxu0 0.0
    %2632 = vmatpush1.xpose.msra.mxu0 %v2270
    %2633 = vmatprep.subr.mxu0 0.0
    %2634 = vmatpush1.xpose.msra.mxu0 %v2273
    %2635 = vmatprep.subr.mxu0 0.0
    %2636 = vmatpush1.xpose.msra.mxu0 %v2276
    %2637 = vmatprep.subr.mxu0 0.0
    %2638 = vmatpush1.xpose.msra.mxu0 %v2279
    %2639 = vmatprep.subr.mxu0 0.0
    %2640 = vmatpush1.xpose.msra.mxu0 %v2282
    %2641 = vmatprep.subr.mxu0 0.0
    %2642 = vmatpush1.xpose.msra.mxu0 %v2285
    %2643 = vmatprep.subr.mxu0 0.0
    %2644 = vmatpush1.xpose.msra.mxu0 %v2288
    %2645 = vmatprep.subr.mxu0 0.0
    %2646 = vmatpush1.xpose.msra.mxu0 %v2291
    %2647 = vmatprep.subr.mxu0 0.0
    %2648 = vmatpush1.xpose.msra.mxu0 %v2294
    %2649 = vmatprep.subr.mxu0 0.0
    %2650 = vmatpush1.xpose.msra.mxu0 %v2297
    %2651 = vmatprep.subr.mxu0 0.0
    %2652 = vmatpush1.xpose.msra.mxu0 %v2300
    %2653 = vmatprep.subr.mxu0 0.0
    %2654 = vmatpush1.xpose.msra.mxu0 %v2303
    %2655 = vmatprep.subr.mxu0 0.0
    %2656 = vmatpush1.xpose.msra.mxu0 %v2306
    %2657 = vmatprep.subr.mxu0 0.0
    %2658 = vmatpush1.xpose.msra.mxu0 %v2309
    %2659 = vmatprep.subr.mxu0 0.0
    %2660 = vmatpush1.xpose.msra.mxu0 %v2312
    %2661 = vmatprep.subr.mxu0 0.0
    %2662 = vmatpush1.xpose.msra.mxu0 %v2315
    %2663 = vmatprep.subr.mxu0 0.0
    %2664 = vmatpush1.xpose.msra.mxu0 %v2318
    %2665 = vmatprep.subr.mxu0 0.0
    %2666 = vmatpush1.xpose.msra.mxu0 %v2321
    %2667 = vmatprep.subr.mxu0 0.0
    %2668 = vmatpush1.xpose.msra.mxu0 %v2324
    %2669 = vmatprep.subr.mxu0 0.0
    %2670 = vmatpush1.xpose.msra.mxu0 %v2327
    %2671 = vmatprep.subr.mxu0 0.0
    %2672 = vmatpush1.xpose.msra.mxu0 %v2330
    %2673 = vmatprep.subr.mxu0 0.0
    %2674 = vmatpush1.xpose.msra.mxu0 %v2333
    %2675 = vmatprep.subr.mxu0 0.0
    %2676 = vmatpush1.xpose.msra.mxu0 %v2336
    %2677 = vmatprep.subr.mxu0 0.0
    %2678 = vmatpush1.xpose.msra.mxu0 %v2339
    %2679 = vmatprep.subr.mxu0 0.0
    %2680 = vmatpush1.xpose.msra.mxu0 %v2342
    %2681 = vmatprep.subr.mxu0 0.0
    %2682 = vmatpush1.xpose.msra.mxu0 %v2345
    %2683 = vmatprep.subr.mxu0 0.0
    %2684 = vmatpush1.xpose.msra.mxu0 %v2348
    %2685 = vmatprep.subr.mxu0 0.0
    %2686 = vmatpush1.xpose.msra.mxu0 %v2351
    %2687 = vmatprep.subr.mxu0 0.0
    %2688 = vmatpush1.xpose.msra.mxu0 %v2354
    %2689 = vmatprep.mubr.f32.mxu0 0.0
    %2690 = vmatmul.mubr.f32.gmra.mrb[0].mxu0 %v2159
    %v2691 = vpop.f32.mrb[0].mxu0
    %v2692 = vadd.f32 %v1993, %v2691
    %v2693 = vpop.f32.mrb[0].mxu0
    %v2694 = vadd.f32 %v1995, %v2693
    %2695 = vmatprep.mubr.f32.mxu0 0.0
    %2696 = vmatmul.mubr.f32.gmra.mrb[0].mxu0 %v2162
    %v2697 = vpop.f32.mrb[0].mxu0
    %v2698 = vadd.f32 %v1999, %v2697
    %v2699 = vpop.f32.mrb[0].mxu0
    %v2700 = vadd.f32 %v2001, %v2699
    %2701 = vdwg.mxu0
    %2702 = vmatprep.subr.mxu0 0.0
    %2703 = vmatpush1.xpose.msra.mxu0 %v2357
    %2704 = vmatprep.subr.mxu0 0.0
    %2705 = vmatpush1.xpose.msra.mxu0 %v2360
    %2706 = vmatprep.subr.mxu0 0.0
    %2707 = vmatpush1.xpose.msra.mxu0 %v2363
    %2708 = vmatprep.subr.mxu0 0.0
    %2709 = vmatpush1.xpose.msra.mxu0 %v2366
    %2710 = vmatprep.subr.mxu0 0.0
    %2711 = vmatpush1.xpose.msra.mxu0 %v2369
    %2712 = vmatprep.subr.mxu0 0.0
    %2713 = vmatpush1.xpose.msra.mxu0 %v2372
    %2714 = vmatprep.subr.mxu0 0.0
    %2715 = vmatpush1.xpose.msra.mxu0 %v2375
    %2716 = vmatprep.subr.mxu0 0.0
    %2717 = vmatpush1.xpose.msra.mxu0 %v2378
    %2718 = vmatprep.subr.mxu0 0.0
    %2719 = vmatpush1.xpose.msra.mxu0 %v2381
    %2720 = vmatprep.subr.mxu0 0.0
    %2721 = vmatpush1.xpose.msra.mxu0 %v2384
    %2722 = vmatprep.subr.mxu0 0.0
    %2723 = vmatpush1.xpose.msra.mxu0 %v2387
    %2724 = vmatprep.subr.mxu0 0.0
    %2725 = vmatpush1.xpose.msra.mxu0 %v2390
    %2726 = vmatprep.subr.mxu0 0.0
    %2727 = vmatpush1.xpose.msra.mxu0 %v2393
    %2728 = vmatprep.subr.mxu0 0.0
    %2729 = vmatpush1.xpose.msra.mxu0 %v2396
    %2730 = vmatprep.subr.mxu0 0.0
    %2731 = vmatpush1.xpose.msra.mxu0 %v2399
    %2732 = vmatprep.subr.mxu0 0.0
    %2733 = vmatpush1.xpose.msra.mxu0 %v2402
    %2734 = vmatprep.subr.mxu0 0.0
    %2735 = vmatpush1.xpose.msra.mxu0 %v2405
    %2736 = vmatprep.subr.mxu0 0.0
    %2737 = vmatpush1.xpose.msra.mxu0 %v2408
    %2738 = vmatprep.subr.mxu0 0.0
    %2739 = vmatpush1.xpose.msra.mxu0 %v2411
    %2740 = vmatprep.subr.mxu0 0.0
    %2741 = vmatpush1.xpose.msra.mxu0 %v2414
    %2742 = vmatprep.subr.mxu0 0.0
    %2743 = vmatpush1.xpose.msra.mxu0 %v2417
    %2744 = vmatprep.subr.mxu0 0.0
    %2745 = vmatpush1.xpose.msra.mxu0 %v2420
    %2746 = vmatprep.subr.mxu0 0.0
    %2747 = vmatpush1.xpose.msra.mxu0 %v2423
    %2748 = vmatprep.subr.mxu0 0.0
    %2749 = vmatpush1.xpose.msra.mxu0 %v2426
    %2750 = vmatprep.subr.mxu0 0.0
    %2751 = vmatpush1.xpose.msra.mxu0 %v2429
    %2752 = vmatprep.subr.mxu0 0.0
    %2753 = vmatpush1.xpose.msra.mxu0 %v2432
    %2754 = vmatprep.subr.mxu0 0.0
    %2755 = vmatpush1.xpose.msra.mxu0 %v2435
    %2756 = vmatprep.subr.mxu0 0.0
    %2757 = vmatpush1.xpose.msra.mxu0 %v2438
    %2758 = vmatprep.subr.mxu0 0.0
    %2759 = vmatpush1.xpose.msra.mxu0 %v2441
    %2760 = vmatprep.subr.mxu0 0.0
    %2761 = vmatpush1.xpose.msra.mxu0 %v2444
    %2762 = vmatprep.subr.mxu0 0.0
    %2763 = vmatpush1.xpose.msra.mxu0 %v2447
    %2764 = vmatprep.subr.mxu0 0.0
    %2765 = vmatpush1.xpose.msra.mxu0 %v2450
    %2766 = vmatprep.mubr.f32.mxu0 0.0
    %2767 = vmatmul.mubr.f32.gmra.mrb[0].mxu0 %v2159
    %v2768 = vpop.f32.mrb[0].mxu0
    %v2769 = vadd.f32 %v2070, %v2768
    %v2770 = vpop.f32.mrb[0].mxu0
    %v2771 = vadd.f32 %v2072, %v2770
    %2772 = vmatprep.mubr.f32.mxu0 0.0
    %2773 = vmatmul.mubr.f32.gmra.mrb[0].mxu0 %v2162
    %v2774 = vpop.f32.mrb[0].mxu0
    %v2775 = vadd.f32 %v2076, %v2774
    %v2776 = vpop.f32.mrb[0].mxu0
    %v2777 = vadd.f32 %v2078, %v2776
    %2778 = vdwg.mxu0
    %2779 = vmatprep.subr.mxu0 0.0
    %2780 = vmatpush1.xpose.msra.mxu0 %v2453
    %2781 = vmatprep.subr.mxu0 0.0
    %2782 = vmatpush1.xpose.msra.mxu0 %v2456
    %2783 = vmatprep.subr.mxu0 0.0
    %2784 = vmatpush1.xpose.msra.mxu0 %v2459
    %2785 = vmatprep.subr.mxu0 0.0
    %2786 = vmatpush1.xpose.msra.mxu0 %v2462
    %2787 = vmatprep.subr.mxu0 0.0
    %2788 = vmatpush1.xpose.msra.mxu0 %v2465
    %2789 = vmatprep.subr.mxu0 0.0
    %2790 = vmatpush1.xpose.msra.mxu0 %v2468
    %2791 = vmatprep.subr.mxu0 0.0
    %2792 = vmatpush1.xpose.msra.mxu0 %v2471
    %2793 = vmatprep.subr.mxu0 0.0
    %2794 = vmatpush1.xpose.msra.mxu0 %v2474
    %2795 = vmatprep.subr.mxu0 0.0
    %2796 = vmatpush1.xpose.msra.mxu0 %v2477
    %2797 = vmatprep.subr.mxu0 0.0
    %2798 = vmatpush1.xpose.msra.mxu0 %v2480
    %2799 = vmatprep.subr.mxu0 0.0
    %2800 = vmatpush1.xpose.msra.mxu0 %v2483
    %2801 = vmatprep.subr.mxu0 0.0
    %2802 = vmatpush1.xpose.msra.mxu0 %v2486
    %2803 = vmatprep.subr.mxu0 0.0
    %2804 = vmatpush1.xpose.msra.mxu0 %v2489
    %2805 = vmatprep.subr.mxu0 0.0
    %2806 = vmatpush1.xpose.msra.mxu0 %v2492
    %2807 = vmatprep.subr.mxu0 0.0
    %2808 = vmatpush1.xpose.msra.mxu0 %v2495
    %2809 = vmatprep.subr.mxu0 0.0
    %2810 = vmatpush1.xpose.msra.mxu0 %v2498
    %2811 = vmatprep.subr.mxu0 0.0
    %2812 = vmatpush1.xpose.msra.mxu0 %v2501
    %2813 = vmatprep.subr.mxu0 0.0
    %2814 = vmatpush1.xpose.msra.mxu0 %v2504
    %2815 = vmatprep.subr.mxu0 0.0
    %2816 = vmatpush1.xpose.msra.mxu0 %v2507
    %2817 = vmatprep.subr.mxu0 0.0
    %2818 = vmatpush1.xpose.msra.mxu0 %v2510
    %2819 = vmatprep.subr.mxu0 0.0
    %2820 = vmatpush1.xpose.msra.mxu0 %v2513
    %2821 = vmatprep.subr.mxu0 0.0
    %2822 = vmatpush1.xpose.msra.mxu0 %v2516
    %2823 = vmatprep.subr.mxu0 0.0
    %2824 = vmatpush1.xpose.msra.mxu0 %v2519
    %2825 = vmatprep.subr.mxu0 0.0
    %2826 = vmatpush1.xpose.msra.mxu0 %v2522
    %2827 = vmatprep.subr.mxu0 0.0
    %2828 = vmatpush1.xpose.msra.mxu0 %v2525
    %2829 = vmatprep.subr.mxu0 0.0
    %2830 = vmatpush1.xpose.msra.mxu0 %v2528
    %2831 = vmatprep.subr.mxu0 0.0
    %2832 = vmatpush1.xpose.msra.mxu0 %v2531
    %2833 = vmatprep.subr.mxu0 0.0
    %2834 = vmatpush1.xpose.msra.mxu0 %v2534
    %2835 = vmatprep.subr.mxu0 0.0
    %2836 = vmatpush1.xpose.msra.mxu0 %v2537
    %2837 = vmatprep.subr.mxu0 0.0
    %2838 = vmatpush1.xpose.msra.mxu0 %v2540
    %2839 = vmatprep.subr.mxu0 0.0
    %2840 = vmatpush1.xpose.msra.mxu0 %v2543
    %2841 = vmatprep.subr.mxu0 0.0
    %2842 = vmatpush1.xpose.msra.mxu0 %v2546
    %2843 = vmatprep.mubr.f32.mxu0 0.0
    %2844 = vmatmul.mubr.f32.gmra.mrb[0].mxu0 %v2159
    %v2845 = vpop.f32.mrb[0].mxu0
    %v2846 = vadd.f32 %v2147, %v2845
    %v2847 = vpop.f32.mrb[0].mxu0
    %v2848 = vadd.f32 %v2149, %v2847
    %2849 = vmatprep.mubr.f32.mxu0 0.0
    %2850 = vmatmul.mubr.f32.gmra.mrb[0].mxu0 %v2162
    %v2851 = vpop.f32.mrb[0].mxu0
    %v2852 = vadd.f32 %v2153, %v2851
    %v2853 = vpop.f32.mrb[0].mxu0
    %v2854 = vadd.f32 %v2155, %v2853
    %2855 = vdwg.mxu0
    %v2856 = vld [vmem:[%s6] sm:$0xff]
    %v2857 = vld [vmem:[%s6 + $0x8] sm:$0xff]
    %2859 = vset.pattern.permute.xlu0 0
    %2860 = vperm.xlu0 %2859, %v2856
    %v2861 = vpop.permute.xlu0 %2860
    %2864 = vset.pattern.permute.xlu0 0
    %2865 = vperm.xlu0 %2864, %v2857
    %v2866 = vpop.permute.xlu0 %2865
    %v2868 = vadd.f32 %v2615, %v2861
    %v2869 = vadd.f32 %v2617, %v2861
    %v2870 = vadd.f32 %v2692, %v2861
    %v2871 = vadd.f32 %v2694, %v2861
    %v2872 = vadd.f32 %v2769, %v2861
    %v2873 = vadd.f32 %v2771, %v2861
    %v2874 = vadd.f32 %v2846, %v2861
    %v2875 = vadd.f32 %v2848, %v2861
    %v2876 = vadd.f32 %v2621, %v2866
    %v2877 = vadd.f32 %v2623, %v2866
    %v2878 = vadd.f32 %v2698, %v2866
    %v2879 = vadd.f32 %v2700, %v2866
    %v2880 = vadd.f32 %v2775, %v2866
    %v2881 = vadd.f32 %v2777, %v2866
    %v2882 = vadd.f32 %v2852, %v2866
    %v2883 = vadd.f32 %v2854, %v2866
    %v2884 = vld [vmem:[#allocation3] sm:$0xff]
    %v2885 = vld [vmem:[#allocation3 + $0x8] sm:$0xff]
    %v2886 = vld [vmem:[#allocation3 + $0x10] sm:$0xff]
    %v2887 = vld [vmem:[#allocation3 + $0x18] sm:$0xff]
    %v2892 = vcombine.high %v2884, %v2884
    %v2893 = vcombine.high %v2885, %v2885
    %v2894 = vcombine.high %v2886, %v2886
    %v2895 = vcombine.high %v2887, %v2887
    %v2900 = vcombine.low %v2884, %v2884
    %v2901 = vcombine.low %v2885, %v2885
    %v2902 = vcombine.low %v2886, %v2886
    %v2903 = vcombine.low %v2887, %v2887
    %v2908 = vsel %vm1832, %v2884, %v2900
    %v2909 = vsel %vm1832, %v2892, %v2884
    %v2910 = vsel %vm1832, %v2885, %v2901
    %v2911 = vsel %vm1832, %v2893, %v2885
    %v2912 = vsel %vm1832, %v2886, %v2902
    %v2913 = vsel %vm1832, %v2894, %v2886
    %v2914 = vsel %vm1832, %v2887, %v2903
    %v2915 = vsel %vm1832, %v2895, %v2887
    %v2916 = vld [vmem:[%s7] sm:$0xff]
    %2918 = vset.pattern.permute.xlu0 0
    %2919 = vperm.xlu0 %2918, %v2916
    %v2920 = vpop.permute.xlu0 %2919
    %v2922 = vmul.f32 %v2920, %v2908
    %v2923 = vmul.f32 %v2920, %v2909
    %v2924 = vmul.f32 %v2920, %v2910
    %v2925 = vmul.f32 %v2920, %v2911
    %v2926 = vmul.f32 %v2920, %v2912
    %v2927 = vmul.f32 %v2920, %v2913
    %v2928 = vmul.f32 %v2920, %v2914
    %v2929 = vmul.f32 %v2920, %v2915
    %v2930 = vadd.f32 %v2868, %v2922
    %v2931 = vadd.f32 %v2869, %v2923
    %v2932 = vadd.f32 %v2870, %v2924
    %v2933 = vadd.f32 %v2871, %v2925
    %v2934 = vadd.f32 %v2872, %v2926
    %v2935 = vadd.f32 %v2873, %v2927
    %v2936 = vadd.f32 %v2874, %v2928
    %v2937 = vadd.f32 %v2875, %v2929
    %v2938 = vmul.f32 %v2930, 0.5
    %v2939 = vmul.f32 %v2931, 0.5
    %v2940 = vmul.f32 %v2932, 0.5
    %v2941 = vmul.f32 %v2933, 0.5
    %v2942 = vmul.f32 %v2934, 0.5
    %v2943 = vmul.f32 %v2935, 0.5
    %v2944 = vmul.f32 %v2936, 0.5
    %v2945 = vmul.f32 %v2937, 0.5
    %v2946 = vtanh.pop %v2938
    %v2947 = vtanh.pop %v2939
    %v2948 = vtanh.pop %v2940
    %v2949 = vtanh.pop %v2941
    %v2950 = vtanh.pop %v2942
    %v2951 = vtanh.pop %v2943
    %v2952 = vtanh.pop %v2944
    %v2953 = vtanh.pop %v2945
    %v2954 = vmul.f32 %v2946, 0.5
    %v2955 = vmul.f32 %v2947, 0.5
    %v2956 = vmul.f32 %v2948, 0.5
    %v2957 = vmul.f32 %v2949, 0.5
    %v2958 = vmul.f32 %v2950, 0.5
    %v2959 = vmul.f32 %v2951, 0.5
    %v2960 = vmul.f32 %v2952, 0.5
    %v2961 = vmul.f32 %v2953, 0.5
    %v2962 = vadd.f32 %v2954, 0.5
    %v2963 = vadd.f32 %v2955, 0.5
    %v2964 = vadd.f32 %v2956, 0.5
    %v2965 = vadd.f32 %v2957, 0.5
    %v2966 = vadd.f32 %v2958, 0.5
    %v2967 = vadd.f32 %v2959, 0.5
    %v2968 = vadd.f32 %v2960, 0.5
    %v2969 = vadd.f32 %v2961, 0.5
    %v2970 = vtanh.pop %v2876
    %v2971 = vtanh.pop %v2877
    %v2972 = vtanh.pop %v2878
    %v2973 = vtanh.pop %v2879
    %v2974 = vtanh.pop %v2880
    %v2975 = vtanh.pop %v2881
    %v2976 = vtanh.pop %v2882
    %v2977 = vtanh.pop %v2883
    %v2978 = vmul.f32 %v2962, %v2900
    %v2979 = vmul.f32 %v2963, %v2884
    %v2980 = vmul.f32 %v2964, %v2901
    %v2981 = vmul.f32 %v2965, %v2885
    %v2982 = vmul.f32 %v2966, %v2902
    %v2983 = vmul.f32 %v2967, %v2886
    %v2984 = vmul.f32 %v2968, %v2903
    %v2985 = vmul.f32 %v2969, %v2887
    %v2986 = vmul.f32 %v2962, %v2970
    %v2987 = vmul.f32 %v2963, %v2971
    %v2988 = vmul.f32 %v2964, %v2972
    %v2989 = vmul.f32 %v2965, %v2973
    %v2990 = vmul.f32 %v2966, %v2974
    %v2991 = vmul.f32 %v2967, %v2975
    %v2992 = vmul.f32 %v2968, %v2976
    %v2993 = vmul.f32 %v2969, %v2977
    %v3002 = vrot.slane %v2986, 4
    %v3003 = vrot.slane %v2987, 4
    %v3004 = vrot.slane %v2988, 4
    %v3005 = vrot.slane %v2989, 4
    %v3006 = vrot.slane %v2990, 4
    %v3007 = vrot.slane %v2991, 4
    %v3008 = vrot.slane %v2992, 4
    %v3009 = vrot.slane %v2993, 4
    %v3018 = vadd.f32 %v2978, %v3002
    %v3019 = vadd.f32 %v2979, %v3003
    %v3020 = vadd.f32 %v2980, %v3004
    %v3021 = vadd.f32 %v2981, %v3005
    %v3022 = vadd.f32 %v2982, %v3006
    %v3023 = vadd.f32 %v2983, %v3007
    %v3024 = vadd.f32 %v2984, %v3008
    %v3025 = vadd.f32 %v2985, %v3009
    %v3026 = vld [vmem:[%s7 + $0xc] sm:$0xf]
    %3028 = vset.pattern.permute.xlu0 0
    %3029 = vperm.xlu0 %3028, %v3026
    %v3030 = vpop.permute.xlu0 %3029
    %v3040 = vrot.slane %v3018, 4
    %v3041 = vrot.slane %v3019, 4
    %v3042 = vrot.slane %v3020, 4
    %v3043 = vrot.slane %v3021, 4
    %v3044 = vrot.slane %v3022, 4
    %v3045 = vrot.slane %v3023, 4
    %v3046 = vrot.slane %v3024, 4
    %v3047 = vrot.slane %v3025, 4
    %v3056 = vmul.f32 %v3030, %v3040
    %v3057 = vmul.f32 %v3030, %v3041
    %v3058 = vmul.f32 %v3030, %v3042
    %v3059 = vmul.f32 %v3030, %v3043
    %v3060 = vmul.f32 %v3030, %v3044
    %v3061 = vmul.f32 %v3030, %v3045
    %v3062 = vmul.f32 %v3030, %v3046
    %v3063 = vmul.f32 %v3030, %v3047
    %v3072 = vrot.slane %v3056, 4
    %v3073 = vrot.slane %v3057, 4
    %v3074 = vrot.slane %v3058, 4
    %v3075 = vrot.slane %v3059, 4
    %v3076 = vrot.slane %v3060, 4
    %v3077 = vrot.slane %v3061, 4
    %v3078 = vrot.slane %v3062, 4
    %v3079 = vrot.slane %v3063, 4
    %v3088 = vadd.f32 %v2876, %v3072
    %v3089 = vadd.f32 %v2877, %v3073
    %v3090 = vadd.f32 %v2878, %v3074
    %v3091 = vadd.f32 %v2879, %v3075
    %v3092 = vadd.f32 %v2880, %v3076
    %v3093 = vadd.f32 %v2881, %v3077
    %v3094 = vadd.f32 %v2882, %v3078
    %v3095 = vadd.f32 %v2883, %v3079
    %v3096 = vmul.f32 %v3088, 0.5
    %v3097 = vmul.f32 %v3089, 0.5
    %v3098 = vmul.f32 %v3090, 0.5
    %v3099 = vmul.f32 %v3091, 0.5
    %v3100 = vmul.f32 %v3092, 0.5
    %v3101 = vmul.f32 %v3093, 0.5
    %v3102 = vmul.f32 %v3094, 0.5
    %v3103 = vmul.f32 %v3095, 0.5
    %v3104 = vtanh.pop %v3096
    %v3105 = vtanh.pop %v3097
    %v3106 = vtanh.pop %v3098
    %v3107 = vtanh.pop %v3099
    %v3108 = vtanh.pop %v3100
    %v3109 = vtanh.pop %v3101
    %v3110 = vtanh.pop %v3102
    %v3111 = vtanh.pop %v3103
    %v3112 = vmul.f32 %v3104, 0.5
    %v3113 = vmul.f32 %v3105, 0.5
    %v3114 = vmul.f32 %v3106, 0.5
    %v3115 = vmul.f32 %v3107, 0.5
    %v3116 = vmul.f32 %v3108, 0.5
    %v3117 = vmul.f32 %v3109, 0.5
    %v3118 = vmul.f32 %v3110, 0.5
    %v3119 = vmul.f32 %v3111, 0.5
    %v3120 = vadd.f32 %v3112, 0.5
    %v3121 = vadd.f32 %v3113, 0.5
    %v3122 = vadd.f32 %v3114, 0.5
    %v3123 = vadd.f32 %v3115, 0.5
    %v3124 = vadd.f32 %v3116, 0.5
    %v3125 = vadd.f32 %v3117, 0.5
    %v3126 = vadd.f32 %v3118, 0.5
    %v3127 = vadd.f32 %v3119, 0.5
    %v3128 = vtanh.pop %v3018
    %v3129 = vtanh.pop %v3019
    %v3130 = vtanh.pop %v3020
    %v3131 = vtanh.pop %v3021
    %v3132 = vtanh.pop %v3022
    %v3133 = vtanh.pop %v3023
    %v3134 = vtanh.pop %v3024
    %v3135 = vtanh.pop %v3025
    %v3136 = vmul.f32 %v3120, %v3128
    %v3137 = vmul.f32 %v3121, %v3129
    %v3138 = vmul.f32 %v3122, %v3130
    %v3139 = vmul.f32 %v3123, %v3131
    %v3140 = vmul.f32 %v3124, %v3132
    %v3141 = vmul.f32 %v3125, %v3133
    %v3142 = vmul.f32 %v3126, %v3134
    %v3143 = vmul.f32 %v3127, %v3135
    %v3152 = vcombine.high %v3136, %v3137
    %v3153 = vcombine.high %v3138, %v3139
    %v3154 = vcombine.high %v3140, %v3141
    %v3155 = vcombine.high %v3142, %v3143
    %3160 = vst [vmem:[#allocation2] sm:$0xff] %v3152
    %3161 = vst [vmem:[#allocation2 + $0x8] sm:$0xff] %v3153
    %3162 = vst [vmem:[#allocation2 + $0x10] sm:$0xff] %v3154
    %3163 = vst [vmem:[#allocation2 + $0x18] sm:$0xff] %v3155
    %v3164 = vcombine.high %v3018, %v3019
    %v3165 = vcombine.high %v3020, %v3021
    %v3166 = vcombine.high %v3022, %v3023
    %v3167 = vcombine.high %v3024, %v3025
    %3172 = vst [vmem:[#allocation3] sm:$0xff] %v3164
    %3173 = vst [vmem:[#allocation3 + $0x8] sm:$0xff] %v3165
    %3174 = vst [vmem:[#allocation3 + $0x10] sm:$0xff] %v3166
    %3175 = vst [vmem:[#allocation3 + $0x18] sm:$0xff] %v3167
    %v3176 = vmax.f32 %v3136, 0.0
    %v3177 = vmax.f32 %v3137, 0.0
    %v3178 = vmax.f32 %v3138, 0.0
    %v3179 = vmax.f32 %v3139, 0.0
    %v3180 = vmax.f32 %v3140, 0.0
    %v3181 = vmax.f32 %v3141, 0.0
    %v3182 = vmax.f32 %v3142, 0.0
    %v3183 = vmax.f32 %v3143, 0.0
    %v3184 = vld [vmem:[%s8] sm:$0x1]
    %3186 = vset.pattern.permute.xlu0 0
    %3187 = vperm.xlu0 %3186, %v3184
    %v3188 = vpop.permute.xlu0 %3187
    %v3198 = vrot.slane %v3176, 4
    %v3199 = vrot.slane %v3177, 4
    %v3200 = vrot.slane %v3178, 4
    %v3201 = vrot.slane %v3179, 4
    %v3202 = vrot.slane %v3180, 4
    %v3203 = vrot.slane %v3181, 4
    %v3204 = vrot.slane %v3182, 4
    %v3205 = vrot.slane %v3183, 4
    %v3214 = vmul.f32 %v3188, %v3198
    %v3215 = vmul.f32 %v3188, %v3199
    %v3216 = vmul.f32 %v3188, %v3200
    %v3217 = vmul.f32 %v3188, %v3201
    %v3218 = vmul.f32 %v3188, %v3202
    %v3219 = vmul.f32 %v3188, %v3203
    %v3220 = vmul.f32 %v3188, %v3204
    %v3221 = vmul.f32 %v3188, %v3205
    %v3222 = vld [vmem:[%s8 + $0x1] sm:$0x1]
    %3224 = vset.pattern.permute.xlu0 0
    %3225 = vperm.xlu0 %3224, %v3222
    %v3226 = vpop.permute.xlu0 %3225
    %v3228 = vrot.slane %v3176, 5
    %v3229 = vrot.slane %v3177, 5
    %v3230 = vrot.slane %v3178, 5
    %v3231 = vrot.slane %v3179, 5
    %v3232 = vrot.slane %v3180, 5
    %v3233 = vrot.slane %v3181, 5
    %v3234 = vrot.slane %v3182, 5
    %v3235 = vrot.slane %v3183, 5
    %v3244 = vmul.f32 %v3226, %v3228
    %v3245 = vmul.f32 %v3226, %v3229
    %v3246 = vmul.f32 %v3226, %v3230
    %v3247 = vmul.f32 %v3226, %v3231
    %v3248 = vmul.f32 %v3226, %v3232
    %v3249 = vmul.f32 %v3226, %v3233
    %v3250 = vmul.f32 %v3226, %v3234
    %v3251 = vmul.f32 %v3226, %v3235
    %v3252 = vadd.f32 %v3214, %v3244
    %v3253 = vadd.f32 %v3215, %v3245
    %v3254 = vadd.f32 %v3216, %v3246
    %v3255 = vadd.f32 %v3217, %v3247
    %v3256 = vadd.f32 %v3218, %v3248
    %v3257 = vadd.f32 %v3219, %v3249
    %v3258 = vadd.f32 %v3220, %v3250
    %v3259 = vadd.f32 %v3221, %v3251
    %v3260 = vld [vmem:[%s8 + $0x2] sm:$0x1]
    %3262 = vset.pattern.permute.xlu0 0
    %3263 = vperm.xlu0 %3262, %v3260
    %v3264 = vpop.permute.xlu0 %3263
    %v3266 = vrot.slane %v3176, 6
    %v3267 = vrot.slane %v3177, 6
    %v3268 = vrot.slane %v3178, 6
    %v3269 = vrot.slane %v3179, 6
    %v3270 = vrot.slane %v3180, 6
    %v3271 = vrot.slane %v3181, 6
    %v3272 = vrot.slane %v3182, 6
    %v3273 = vrot.slane %v3183, 6
    %v3282 = vmul.f32 %v3264, %v3266
    %v3283 = vmul.f32 %v3264, %v3267
    %v3284 = vmul.f32 %v3264, %v3268
    %v3285 = vmul.f32 %v3264, %v3269
    %v3286 = vmul.f32 %v3264, %v3270
    %v3287 = vmul.f32 %v3264, %v3271
    %v3288 = vmul.f32 %v3264, %v3272
    %v3289 = vmul.f32 %v3264, %v3273
    %v3290 = vadd.f32 %v3252, %v3282
    %v3291 = vadd.f32 %v3253, %v3283
    %v3292 = vadd.f32 %v3254, %v3284
    %v3293 = vadd.f32 %v3255, %v3285
    %v3294 = vadd.f32 %v3256, %v3286
    %v3295 = vadd.f32 %v3257, %v3287
    %v3296 = vadd.f32 %v3258, %v3288
    %v3297 = vadd.f32 %v3259, %v3289
    %v3298 = vld [vmem:[%s8 + $0x3] sm:$0x1]
    %3300 = vset.pattern.permute.xlu0 0
    %3301 = vperm.xlu0 %3300, %v3298
    %v3302 = vpop.permute.xlu0 %3301
    %v3304 = vadd.f32 %v3290, %v3302
    %v3305 = vadd.f32 %v3291, %v3302
    %v3306 = vadd.f32 %v3292, %v3302
    %v3307 = vadd.f32 %v3293, %v3302
    %v3308 = vadd.f32 %v3294, %v3302
    %v3309 = vadd.f32 %v3295, %v3302
    %v3310 = vadd.f32 %v3296, %v3302
    %v3311 = vadd.f32 %v3297, %v3302
    %v3320 = vcombine.low %v3304, %v3305
    %v3321 = vcombine.low %v3306, %v3307
    %v3322 = vcombine.low %v3308, %v3309
    %v3323 = vcombine.low %v3310, %v3311
    %v3325 = vunpack.c.l.s4 1966171168
    %v3326 = vunpack.c.0.s8 %v3325
    %v3327 = vlaneseq
    %v3328 = vshrl.u32 %v3327, 7
    %v3329 = vsub.s32 %v3326, %v3328
    %v3330 = vrot.slane %v3320, %v3329
    %v3332 = vunpack.c.l.s4 1966171168
    %v3333 = vunpack.c.0.s8 %v3332
    %v3334 = vlaneseq
    %v3335 = vshrl.u32 %v3334, 7
    %v3336 = vsub.s32 %v3333, %v3335
    %v3337 = vrot.slane %v3321, %v3336
    %v3339 = vunpack.c.l.s4 1966171168
    %v3340 = vunpack.c.0.s8 %v3339
    %v3341 = vlaneseq
    %v3342 = vshrl.u32 %v3341, 7
    %v3343 = vsub.s32 %v3340, %v3342
    %v3344 = vrot.slane %v3322, %v3343
    %v3346 = vunpack.c.l.s4 1966171168
    %v3347 = vunpack.c.0.s8 %v3346
    %v3348 = vlaneseq
    %v3349 = vshrl.u32 %v3348, 7
    %v3350 = vsub.s32 %v3347, %v3349
    %v3351 = vrot.slane %v3323, %v3350
    %v3352 = vcombine.low %v3330, %v3337
    %v3353 = vcombine.low %v3344, %v3351
    %v3355 = vunpack.c.l.s4 1966171168
    %v3356 = vunpack.c.0.s8 %v3355
    %v3357 = vlaneseq
    %v3358 = vshrl.u32 %v3357, 7
    %v3359 = vsub.s32 %v3356, %v3358
    %v3360 = vrot.slane %v3352, %v3359
    %v3362 = vunpack.c.l.s4 1966171168
    %v3363 = vunpack.c.0.s8 %v3362
    %v3364 = vlaneseq
    %v3365 = vshrl.u32 %v3364, 7
    %v3366 = vsub.s32 %v3363, %v3365
    %v3367 = vrot.slane %v3353, %v3366
    %v3368 = vcombine.low %v3360, %v3367
    %3370 = vst [vmem:[#allocation4] sm:$0xff] %v3368
    // Predicated region
    $region42: #{recurrent_gcn_forward_seq.1} parent=1 // pred_check
      %p3371 = pneg %p36
    $region43: #{recurrent_gcn_forward_seq.1} parent=1 // pred_check_branch
      %3373 = sbr.rel (%p3371) target = $region45
    $region44: #{recurrent_gcn_forward_seq.1} parent=1 // pred_region
      %v3374 = vld [vmem:[#allocation2] sm:$0xff]
      %v3375 = vld [vmem:[#allocation2 + $0x8] sm:$0xff]
      %v3376 = vld [vmem:[#allocation2 + $0x10] sm:$0xff]
      %v3377 = vld [vmem:[#allocation2 + $0x18] sm:$0xff]
      %3378 = vst [vmem:[%s10] sm:$0xff] %v3374
      %3379 = vst [vmem:[%s10 + $0x8] sm:$0xff] %v3375
      %3380 = vst [vmem:[%s10 + $0x10] sm:$0xff] %v3376
      %3381 = vst [vmem:[%s10 + $0x18] sm:$0xff] %v3377
      %v3382 = vld [vmem:[#allocation3] sm:$0xff]
      %v3383 = vld [vmem:[#allocation3 + $0x8] sm:$0xff]
      %v3384 = vld [vmem:[#allocation3 + $0x10] sm:$0xff]
      %v3385 = vld [vmem:[#allocation3 + $0x18] sm:$0xff]
      %3386 = vst [vmem:[%s11] sm:$0xff] %v3382
      %3387 = vst [vmem:[%s11 + $0x8] sm:$0xff] %v3383
      %3388 = vst [vmem:[%s11 + $0x10] sm:$0xff] %v3384
      %3389 = vst [vmem:[%s11 + $0x18] sm:$0xff] %v3385
    $region45: #{recurrent_gcn_forward_seq.1} parent=1 // pred_fallthru
      _
    // Predicated region
    $region46: #{recurrent_gcn_forward_seq.1} parent=1 // pred_check
      _
    $region47: #{recurrent_gcn_forward_seq.1} parent=1 // pred_check_branch
      %3391 = sbr.rel (0) target = $region49
    $region48: #{recurrent_gcn_forward_seq.1} parent=1 // pred_region
      %s3393 = ssub.s32 128, 128
      %3394 = vsyncadd [#allocation5], %s3393
      %s3396 = sshll.u32 [#allocation4], 4
      %s3397 = int_to_ptr.vmem [resolvable:$true] %s3396
      %3399 = dma.vmem_to_hbm [thread:$0]  %s3397, 128, %s9, [#allocation5]
    $region49: #{recurrent_gcn_forward_seq.1} parent=1 // pred_fallthru
      _
    // Predicated region
    $region50: #{recurrent_gcn_forward_seq.1} parent=1 // pred_check
      _
    $region51: #{recurrent_gcn_forward_seq.1} parent=1 // pred_check_branch
      %3401 = sbr.rel (0) target = $region53
    $region52: #{recurrent_gcn_forward_seq.1} parent=1 // pred_region
      _
    $region53: #{recurrent_gcn_forward_seq.1} parent=1 // pred_fallthru
      _
    // Predicated region
    $region54: #{recurrent_gcn_forward_seq.1} parent=1 // pred_check
      _
    $region55: #{recurrent_gcn_forward_seq.1} parent=1 // pred_check_branch
      %3403 = sbr.rel (0) target = $region57
    $region56: #{recurrent_gcn_forward_seq.1} parent=1 // pred_region
      _
    $region57: #{recurrent_gcn_forward_seq.1} parent=1 // pred_fallthru
      _
    // Predicated region
    $region58: #{recurrent_gcn_forward_seq.1} parent=1 // pred_check
      _
    $region59: #{recurrent_gcn_forward_seq.1} parent=1 // pred_check_branch
      %3405 = sbr.rel (0) target = $region61
    $region60: #{recurrent_gcn_forward_seq.1} parent=1 // pred_region
      %3406 = dma.done [#allocation5], 128
    $region61: #{recurrent_gcn_forward_seq.1} parent=1 // pred_fallthru
      _
    // Predicated region
    $region62: #{recurrent_gcn_forward_seq.1} parent=1 // pred_check
      _
    $region63: #{recurrent_gcn_forward_seq.1} parent=1 // pred_check_branch
      %3408 = sbr.rel (0) target = $region65
    $region64: #{recurrent_gcn_forward_seq.1} parent=1 // pred_region
      _
    $region65: #{recurrent_gcn_forward_seq.1} parent=1 // pred_fallthru
      _
    // Predicated region
    $region66: #{recurrent_gcn_forward_seq.1} parent=1 // pred_check
      _
    $region67: #{recurrent_gcn_forward_seq.1} parent=1 // pred_check_branch
      %3410 = sbr.rel (0) target = $region69
    $region68: #{recurrent_gcn_forward_seq.1} parent=1 // pred_region
      _
    $region69: #{recurrent_gcn_forward_seq.1} parent=1 // pred_fallthru
      _
    %3411 = vsyncpa [#allocation5], 1

</llo_original>
